<compile_context>
chip_gen: v7x
topology: tpu7x:2x2x1
jax: 0.10.0
libtpu: 0.0.40
codegen_flags: <defaults>
</compile_context>

<pallas_src>
import functools

import numpy as np
import jax
import jax.numpy as jnp
from jax import lax
from jax.experimental import pallas as pl
from jax.experimental.pallas import tpu as pltpu

EPS = 1e-5


# ----------------------------------------------------------------------------
# Fused kernel
# ----------------------------------------------------------------------------
def _gn(x, avg_proj):
    """Group/Layer norm via a group-averaging projector matmul (no reshapes).

    avg_proj = G @ G.T / group_size, with G the one-hot group-membership
    matrix, so x @ avg_proj broadcasts the per-group mean back to every
    element.  Affine (gamma/beta) is folded into the following matmul.
    """
    mu = jnp.dot(x, avg_proj, preferred_element_type=jnp.float32)
    xc = x - mu
    var = jnp.dot(xc * xc, avg_proj, preferred_element_type=jnp.float32)
    return xc * lax.rsqrt(var + EPS)


def _dofen_kernel(xnum_ref, oh_ref,
                  a_num_ref, b_num_ref,
                  e_exp_ref, a_cat_ref, w_cat_ref, b_cat_ref,
                  p_num_ref, p_cat_ref,
                  a_rodt_ref, w1_ref, b1_ref, w2_ref, b2_ref,
                  s_sel_ref, s_fe_ref, e_bd_ref,
                  a_for_ref, wh1_ref, bh1_ref, wh2_ref, bh2_ref,
                  out_ref):
    dot = functools.partial(jnp.dot, preferred_element_type=jnp.float32)

    # ---- phi_1 numerical: sigmoid(x_i * w + b), flattened (col, cond) on lanes
    z_num = dot(xnum_ref[...], a_num_ref[...]) + b_num_ref[...]
    m_num = 1.0 / (1.0 + jnp.exp(-z_num))                 # (TB, n_num*n_cond)

    # ---- phi_1 categorical: one-hot embed -> GroupNorm -> per-col dense -> sigmoid
    e = dot(oh_ref[...], e_exp_ref[...])                  # (TB, n_cat*n_cond)
    z_cat = dot(_gn(e, a_cat_ref[...]), w_cat_ref[...]) + b_cat_ref[...]
    m_cat = 1.0 / (1.0 + jnp.exp(-z_cat))

    # ---- static permutation into the rODT layout (folded into matmuls)
    o = dot(m_num, p_num_ref[...]) + dot(m_cat, p_cat_ref[...])   # (TB, n_rodt*d)

    # ---- phi_2: GN -> grouped conv -> ReLU -> GN -> grouped conv (block-diag on MXU)
    h = jnp.maximum(dot(_gn(o, a_rodt_ref[...]), w1_ref[...]) + b1_ref[...], 0.0)
    wgt = dot(_gn(h, a_rodt_ref[...]), w2_ref[...]) + b2_ref[...]  # (TB, n_rodt*n_head)

    # ---- forest: select (forest, head, estimator) weights, softmax over estimators
    ws = dot(wgt, s_sel_ref[...])                         # (TB, nf*nh*ne)
    # subtracting the per-row max is a per-group constant too -> same softmax
    p = jnp.exp(ws - jnp.max(ws, axis=-1, keepdims=True))
    p = p * pl.reciprocal(dot(p, s_fe_ref[...]), approx=True)
    f = dot(p, e_bd_ref[...])                             # (TB, nf*hid)

    # ---- phi_3 bagging head: LN -> Linear -> ReLU -> LN -> Linear (+ mean folded)
    hh = jnp.maximum(dot(_gn(f, a_for_ref[...]), wh1_ref[...]) + bh1_ref[...], 0.0)
    out_ref[...] = dot(_gn(hh, a_for_ref[...]), wh2_ref[...]) + bh2_ref[...]


# ----------------------------------------------------------------------------
# One-time folding of parameters into kernel-friendly static matrices
# ----------------------------------------------------------------------------
def prepare(P, cfg):
    f32 = np.float32
    num_idx, cat_idx = cfg["numerical_index"], cfg["categorical_index"]
    counts = cfg["categorical_count"]
    n_num, n_cat = len(num_idx), len(cat_idx)
    n_cond, n_col, d = cfg["n_cond"], cfg["n_col"], cfg["d"]
    n_rodt, n_head = cfg["n_rodt"], cfg["n_head"]
    nf, ne = cfg["n_forest"], cfg["n_estimator"]
    hid, n_class = cfg["n_hidden"], cfg["n_class"]
    hd = hid // n_head
    NN, NC, NT = n_num * n_cond, n_cat * n_cond, n_col * n_cond
    RH, FH = n_rodt * n_head, nf * n_head
    FHE, FHID = FH * ne, nf * hid
    OUTP = max(128, ((n_class + 127) // 128) * 128)       # lane-dense output width

    def avg_proj(n_groups, group_size, scale=None):
        g = np.kron(np.eye(n_groups, dtype=f32), np.ones((group_size, 1), f32))
        s = (1.0 / group_size) if scale is None else scale
        return (g @ g.T * s).astype(f32)

    # --- numerical phi_1: fold the broadcast of x over n_cond into the weight
    w_num = np.asarray(P["w_num"], f32)
    a_num = np.zeros((n_num, NN), f32)
    for i in range(n_num):
        a_num[i, i * n_cond:(i + 1) * n_cond] = w_num[i]
    b_num_flat = np.asarray(P["b_num"], f32).reshape(1, NN)

    # --- categorical phi_1: embedding gather as one-hot matmul + block-diag dense
    emb = np.asarray(P["emb"], f32)
    offs = np.asarray(P["cat_offset"])
    total_cat = emb.shape[0]
    e_exp = np.zeros((total_cat, NC), f32)
    for k in range(n_cat):
        o0, cnt = int(offs[k]), counts[k]
        e_exp[o0:o0 + cnt, k * n_cond:(k + 1) * n_cond] = emb[o0:o0 + cnt]
    a_cat = avg_proj(n_cat, n_cond)
    gcw = np.asarray(P["cat_gn_w"], f32).reshape(NC)
    gcb = np.asarray(P["cat_gn_b"], f32).reshape(NC)
    w_cat_p = np.asarray(P["w_cat"], f32)
    bd_cat = np.zeros((NC, NC), f32)
    for k in range(n_cat):
        bd_cat[k * n_cond:(k + 1) * n_cond, k * n_cond:(k + 1) * n_cond] = w_cat_p[k]
    w_cat_f = bd_cat * gcw[:, None]                               # GN affine folded
    b_cat_f = (gcb @ bd_cat + np.asarray(P["b_cat"], f32).reshape(NC)).reshape(1, NC)

    # --- permutation (Mflat index = cond*n_col + col) folded into two matmuls
    perm = np.asarray(P["permutator"])
    p_num = np.zeros((NN, NT), f32)
    p_cat = np.zeros((NC, NT), f32)
    for t in range(NT):
        q = int(perm[t])
        c, j = q // n_col, q % n_col
        if j < n_num:
            p_num[j * n_cond + c, t] = 1.0
        else:
            p_cat[(j - n_num) * n_cond + c, t] = 1.0

    # --- phi_2 grouped convs as block-diagonal matmuls (GN affine folded)
    a_rodt = avg_proj(n_rodt, d)
    g1w = np.asarray(P["gn1_w"], f32).reshape(NT)
    g1b = np.asarray(P["gn1_b"], f32).reshape(NT)
    w1p = np.asarray(P["w1"], f32)
    bd1 = np.zeros((NT, NT), f32)
    for g in range(n_rodt):
        bd1[g * d:(g + 1) * d, g * d:(g + 1) * d] = w1p[g]
    w1_f = bd1 * g1w[:, None]
    b1_f = (g1b @ bd1 + np.asarray(P["b1"], f32).reshape(NT)).reshape(1, NT)

    g2w = np.asarray(P["gn2_w"], f32).reshape(NT)
    g2b = np.asarray(P["gn2_b"], f32).reshape(NT)
    w2p = np.asarray(P["w2"], f32)
    bd2 = np.zeros((NT, RH), f32)
    for g in range(n_rodt):
        bd2[g * d:(g + 1) * d, g * n_head:(g + 1) * n_head] = w2p[g]
    w2_f = bd2 * g2w[:, None]
    b2_f = (g2b @ bd2 + np.asarray(P["b2"], f32).reshape(RH)).reshape(1, RH)

    # --- rODT -> (forest, head, estimator) selection and per-group softmax sum
    swr = np.asarray(P["swr"])
    s_sel = np.zeros((RH, FHE), f32)
    for fi in range(nf):
        for e in range(ne):
            r = int(swr[fi, e])
            for h in range(n_head):
                s_sel[r * n_head + h, (fi * n_head + h) * ne + e] = 1.0
    s_fe = avg_proj(FH, ne, scale=1.0)                            # group-sum projector

    # --- rODT embeddings, block-diagonal over (forest, head) groups
    E = np.asarray(P["E"], f32)
    e_rows = (E[swr.reshape(-1)].reshape(nf, ne, n_head, hd)
              .transpose(0, 2, 1, 3).reshape(FH, ne, hd))
    e_bd = np.zeros((FHE, FHID), f32)
    for g in range(FH):
        e_bd[g * ne:(g + 1) * ne, g * hd:(g + 1) * hd] = e_rows[g]

    # --- bagging head: per-forest LN/Linear as kron block-diagonals,
    #     LN affine + final bias + mean-over-forests folded in.
    a_for = avg_proj(nf, hid)
    ln1w = np.tile(np.asarray(P["ln1_w"], f32), nf)
    ln1b = np.tile(np.asarray(P["ln1_b"], f32), nf)
    ln2w = np.tile(np.asarray(P["ln2_w"], f32), nf)
    ln2b = np.tile(np.asarray(P["ln2_b"], f32), nf)
    bl1 = np.tile(np.asarray(P["bl1"], f32), nf)
    bl2 = np.tile(np.asarray(P["bl2"], f32), nf)
    bdh1 = np.kron(np.eye(nf, dtype=f32), np.asarray(P["wl1"], f32))
    wh1_f = bdh1 * ln1w[:, None]
    bh1_f = (ln1b @ bdh1 + bl1).reshape(1, FHID)
    bdh2 = np.kron(np.eye(nf, dtype=f32), np.asarray(P["wl2"], f32))  # (FHID, nf*n_class)
    gc = np.zeros((nf * n_class, OUTP), f32)
    for fi in range(nf):
        for c in range(n_class):
            gc[fi * n_class + c, c] = 1.0 / nf
    wh2_f = (bdh2 * ln2w[:, None]) @ gc
    bh2_f = ((ln2b @ bdh2 + bl2) @ gc).reshape(1, OUTP)

    mats = [a_num, b_num_flat, e_exp, a_cat, w_cat_f, b_cat_f,
            p_num, p_cat, a_rodt, w1_f, b1_f, w2_f, b2_f,
            s_sel, s_fe, e_bd, a_for, wh1_f, bh1_f, wh2_f, bh2_f]
    return [jnp.asarray(m, jnp.float32) for m in mats]


# ----------------------------------------------------------------------------
# Forward wrapper (layout plumbing only)
# ----------------------------------------------------------------------------
def dofen_forward(X, P, cfg, prep=None):
    if prep is None:
        prep = prepare(P, cfg)
    b = X.shape[0]
    n_class = cfg["n_class"]
    counts = cfg["categorical_count"]

    x_num = X[:, jnp.array(cfg["numerical_index"])].astype(jnp.float32)
    x_cat = X[:, jnp.array(cfg["categorical_index"])].astype(jnp.int32)
    oh = jnp.concatenate(
        [jax.nn.one_hot(x_cat[:, k], counts[k], dtype=jnp.float32)
         for k in range(len(counts))], axis=1)

    TB = 8                                             # batch tile (sublane multiple)
    Bp = max(TB, ((b + TB - 1) // TB) * TB)
    xnum_p = jnp.zeros((Bp, x_num.shape[1]), jnp.float32).at[:b].set(x_num)
    oh_p = jnp.zeros((Bp, oh.shape[1]), jnp.float32).at[:b].set(oh)

    OUTP = prep[-1].shape[-1]
    weight_specs = [pl.BlockSpec(m.shape, lambda i: (0, 0)) for m in prep]

    out = pl.pallas_call(
        _dofen_kernel,
        out_shape=jax.ShapeDtypeStruct((Bp, OUTP), jnp.float32),
        grid=(Bp // TB,),
        in_specs=[pl.BlockSpec((TB, x_num.shape[1]), lambda i: (i, 0)),
                  pl.BlockSpec((TB, oh.shape[1]), lambda i: (i, 0))] + weight_specs,
        out_specs=pl.BlockSpec((TB, OUTP), lambda i: (i, 0)),
        compiler_params=pltpu.CompilerParams(dimension_semantics=("parallel",)),
    )(xnum_p, oh_p, *prep)
    return out[:b, :n_class]


# ----------------------------------------------------------------------------
# Pure-JAX reference (unfolded math) for validation
# ----------------------------------------------------------------------------
def dofen_reference(X, P, cfg):
    HI = jax.lax.Precision.HIGHEST
    b = X.shape[0]
    Ms = []
    if cfg["numerical_index"]:
        xn = X[:, jnp.array(cfg["numerical_index"])].astype(jnp.float32)
        Ms.append(jax.nn.sigmoid(xn[:, :, None] * P["w_num"][None] + P["b_num"][None]))
    if cfg["categorical_index"]:
        cx = X[:, jnp.array(cfg["categorical_index"])].astype(jnp.int32) + P["cat_offset"][None]
        e = P["emb"][cx]
        mu = e.mean(-1, keepdims=True)
        var = ((e - mu) ** 2).mean(-1, keepdims=True)
        en = (e - mu) * lax.rsqrt(var + EPS) * P["cat_gn_w"][None] + P["cat_gn_b"][None]
        z = jnp.einsum("bci,cio->bco", en, P["w_cat"], precision=HI) + P["b_cat"][None]
        Ms.append(jax.nn.sigmoid(z))
    M = jnp.concatenate(Ms, axis=1)
    Mflat = jnp.transpose(M, (0, 2, 1)).reshape(b, -1)
    O = Mflat[:, P["permutator"]].reshape(b, cfg["n_rodt"], cfg["d"])
    mu = O.mean(-1, keepdims=True)
    var = ((O - mu) ** 2).mean(-1, keepdims=True)
    On = (O - mu) * lax.rsqrt(var + EPS) * P["gn1_w"][None] + P["gn1_b"][None]
    h = jax.nn.relu(jnp.einsum("bgi,gio->bgo", On, P["w1"], precision=HI) + P["b1"][None])
    mu = h.mean(-1, keepdims=True)
    var = ((h - mu) ** 2).mean(-1, keepdims=True)
    hn = (h - mu) * lax.rsqrt(var + EPS) * P["gn2_w"][None] + P["gn2_b"][None]
    w = jnp.einsum("bgi,gio->bgo", hn, P["w2"], precision=HI) + P["b2"][None]

    nf, ne = cfg["n_forest"], cfg["n_estimator"]
    nh, hid = cfg["n_head"], cfg["n_hidden"]
    wp = jax.nn.softmax(w[:, P["swr"]], axis=-2)[..., None]
    Ep = P["E"][P["swr"]].reshape(1, nf, ne, nh, hid // nh)
    F = (wp * Ep).sum(-3).reshape(b, nf, hid)
    mu = F.mean(-1, keepdims=True)
    var = ((F - mu) ** 2).mean(-1, keepdims=True)
    Fn = (F - mu) * lax.rsqrt(var + EPS) * P["ln1_w"] + P["ln1_b"]
    h = jax.nn.relu(jnp.einsum("bfi,io->bfo", Fn, P["wl1"], precision=HI) + P["bl1"])
    mu = h.mean(-1, keepdims=True)
    var = ((h - mu) ** 2).mean(-1, keepdims=True)
    hn = (h - mu) * lax.rsqrt(var + EPS) * P["ln2_w"] + P["ln2_b"]
    y = jnp.einsum("bfi,io->bfo", hn, P["wl2"], precision=HI) + P["bl2"]
    return y.mean(1)


# ----------------------------------------------------------------------------
# Deterministic parameter / input construction
# ----------------------------------------------------------------------------
def build(cfg, key):
    keys = jax.random.split(key, 24)

    def nrm(k, shape, scale=0.3):
        return scale * jax.random.normal(k, shape, jnp.float32)

    n_num, n_cat = len(cfg["numerical_index"]), len(cfg["categorical_index"])
    n_cond, n_rodt, d = cfg["n_cond"], cfg["n_rodt"], cfg["d"]
    n_head, n_hidden, n_class = cfg["n_head"], cfg["n_hidden"], cfg["n_class"]
    n_total = n_cond * cfg["n_col"]
    total_cat = sum(cfg["categorical_count"])

    P = {
        "w_num": nrm(keys[0], (n_num, n_cond)),
        "b_num": nrm(keys[1], (n_num, n_cond), 0.1),
        "emb": nrm(keys[2], (total_cat, n_cond), 1.0),
        "cat_gn_w": jnp.ones((n_cat, n_cond), jnp.float32),
        "cat_gn_b": jnp.zeros((n_cat, n_cond), jnp.float32),
        "w_cat": nrm(keys[3], (n_cat, n_cond, n_cond)),
        "b_cat": nrm(keys[4], (n_cat, n_cond), 0.1),
        "cat_offset": jnp.array([0] + list(np.cumsum(cfg["categorical_count"])[:-1]),
                                jnp.int32),
        "gn1_w": jnp.ones((n_rodt, d), jnp.float32),
        "gn1_b": jnp.zeros((n_rodt, d), jnp.float32),
        "w1": nrm(keys[5], (n_rodt, d, d)),
        "b1": nrm(keys[6], (n_rodt, d), 0.1),
        "gn2_w": jnp.ones((n_rodt, d), jnp.float32),
        "gn2_b": jnp.zeros((n_rodt, d), jnp.float32),
        "w2": nrm(keys[7], (n_rodt, d, n_head)),
        "b2": nrm(keys[8], (n_rodt, n_head), 0.1),
        "E": nrm(keys[9], (n_rodt, n_hidden), 1.0),
        "ln1_w": jnp.ones((n_hidden,), jnp.float32),
        "ln1_b": jnp.zeros((n_hidden,), jnp.float32),
        "wl1": nrm(keys[10], (n_hidden, n_hidden), 0.2),
        "bl1": nrm(keys[11], (n_hidden,), 0.1),
        "ln2_w": jnp.ones((n_hidden,), jnp.float32),
        "ln2_b": jnp.zeros((n_hidden,), jnp.float32),
        "wl2": nrm(keys[12], (n_hidden, n_class), 0.2),
        "bl2": nrm(keys[13], (n_class,), 0.1),
        "permutator": jnp.argsort(jax.random.uniform(keys[14], (n_total,))).astype(jnp.int32),
        "swr": jnp.argsort(jax.random.uniform(keys[15], (cfg["n_forest"], n_rodt)),
                           axis=-1)[:, :cfg["n_estimator"]].astype(jnp.int32),
    }

    b = cfg["batch"]
    X = jax.random.normal(keys[16], (b, cfg["n_col"]), jnp.float32)
    for j, (col, count) in enumerate(zip(cfg["categorical_index"], cfg["categorical_count"])):
        vals = jax.random.randint(keys[17 + j], (b,), 0, count)
        X = X.at[:, col].set(vals.astype(jnp.float32))
    return P, X


if __name__ == "__main__":
    # Small DOFEN configuration: 4 numerical columns + 2 categorical columns.
    category_column_count = [-1, 3, -1, 5, -1, -1]
    n_class, m, d, n_head, n_forest, n_hidden = 3, 4, 4, 1, 8, 32
    n_col = len(category_column_count)
    n_cond = d * m                                          # 16
    n_rodt = n_cond * n_col // d                            # 24
    n_estimator = max(2, int(n_col ** 0.5)) * n_cond // d   # 8

    cfg = {
        "numerical_index": [i for i, c in enumerate(category_column_count) if c == -1],
        "categorical_index": [i for i, c in enumerate(category_column_count) if c != -1],
        "categorical_count": [c for c in category_column_count if c != -1],
        "n_col": n_col, "n_cond": n_cond, "d": d, "n_rodt": n_rodt,
        "n_estimator": n_estimator, "n_forest": n_forest, "n_head": n_head,
        "n_hidden": n_hidden, "n_class": n_class, "batch": 2,
    }
    # TODO(synk): compute_loss is NotImplemented in the reference module, so only
    # the prediction path is implemented.

    P, X = build(cfg, jax.random.PRNGKey(0))
    prep = prepare(P, cfg)

    y_hat = jax.block_until_ready(dofen_forward(X, P, cfg, prep))
    y_ref = jax.block_until_ready(dofen_reference(X, P, cfg))

    np.testing.assert_allclose(np.asarray(y_hat), np.asarray(y_ref),
                               rtol=2e-3, atol=2e-3)
    assert y_hat.shape == (cfg["batch"], n_class)
    print("KERNEL_OK")
</pallas_src>

<mosaic_0001>
module attributes {stable_mosaic.version = 11 : i64} {
  func.func @_dofen_kernel(%arg0: i32, %arg1: memref<8x4xf32, #tpu.memory_space<vmem>>, %arg2: memref<8x8xf32, #tpu.memory_space<vmem>>, %arg3: memref<4x64xf32, #tpu.memory_space<vmem>>, %arg4: memref<1x64xf32, #tpu.memory_space<vmem>>, %arg5: memref<8x32xf32, #tpu.memory_space<vmem>>, %arg6: memref<32x32xf32, #tpu.memory_space<vmem>>, %arg7: memref<32x32xf32, #tpu.memory_space<vmem>>, %arg8: memref<1x32xf32, #tpu.memory_space<vmem>>, %arg9: memref<64x96xf32, #tpu.memory_space<vmem>>, %arg10: memref<32x96xf32, #tpu.memory_space<vmem>>, %arg11: memref<96x96xf32, #tpu.memory_space<vmem>>, %arg12: memref<96x96xf32, #tpu.memory_space<vmem>>, %arg13: memref<1x96xf32, #tpu.memory_space<vmem>>, %arg14: memref<96x24xf32, #tpu.memory_space<vmem>>, %arg15: memref<1x24xf32, #tpu.memory_space<vmem>>, %arg16: memref<24x64xf32, #tpu.memory_space<vmem>>, %arg17: memref<64x64xf32, #tpu.memory_space<vmem>>, %arg18: memref<64x256xf32, #tpu.memory_space<vmem>>, %arg19: memref<256x256xf32, #tpu.memory_space<vmem>>, %arg20: memref<256x256xf32, #tpu.memory_space<vmem>>, %arg21: memref<1x256xf32, #tpu.memory_space<vmem>>, %arg22: memref<256x128xf32, #tpu.memory_space<vmem>>, %arg23: memref<1x128xf32, #tpu.memory_space<vmem>>, %arg24: memref<8x128xf32, #tpu.memory_space<vmem>>) attributes {dimension_semantics = [#tpu.dimension_semantics<parallel>], iteration_bounds = array<i64: 1>, scalar_prefetch = 0 : i64, scratch_operands = 0 : i64, tpu.core_type = #tpu.core_type<tc>, window_params = [{transform_indices = @transform_0, window_bounds = array<i64: 8, 4>}, {transform_indices = @transform_1, window_bounds = array<i64: 8, 8>}, {pipeline_mode = #tpu.pipeline_mode<synchronous>, transform_indices = @transform_2, window_bounds = array<i64: 4, 64>}, {pipeline_mode = #tpu.pipeline_mode<synchronous>, transform_indices = @transform_3, window_bounds = array<i64: 1, 64>}, {pipeline_mode = #tpu.pipeline_mode<synchronous>, transform_indices = @transform_4, window_bounds = array<i64: 8, 32>}, {pipeline_mode = #tpu.pipeline_mode<synchronous>, transform_indices = @transform_5, window_bounds = array<i64: 32, 32>}, {pipeline_mode = #tpu.pipeline_mode<synchronous>, transform_indices = @transform_6, window_bounds = array<i64: 32, 32>}, {pipeline_mode = #tpu.pipeline_mode<synchronous>, transform_indices = @transform_7, window_bounds = array<i64: 1, 32>}, {pipeline_mode = #tpu.pipeline_mode<synchronous>, transform_indices = @transform_8, window_bounds = array<i64: 64, 96>}, {pipeline_mode = #tpu.pipeline_mode<synchronous>, transform_indices = @transform_9, window_bounds = array<i64: 32, 96>}, {pipeline_mode = #tpu.pipeline_mode<synchronous>, transform_indices = @transform_10, window_bounds = array<i64: 96, 96>}, {pipeline_mode = #tpu.pipeline_mode<synchronous>, transform_indices = @transform_11, window_bounds = array<i64: 96, 96>}, {pipeline_mode = #tpu.pipeline_mode<synchronous>, transform_indices = @transform_12, window_bounds = array<i64: 1, 96>}, {pipeline_mode = #tpu.pipeline_mode<synchronous>, transform_indices = @transform_13, window_bounds = array<i64: 96, 24>}, {pipeline_mode = #tpu.pipeline_mode<synchronous>, transform_indices = @transform_14, window_bounds = array<i64: 1, 24>}, {pipeline_mode = #tpu.pipeline_mode<synchronous>, transform_indices = @transform_15, window_bounds = array<i64: 24, 64>}, {pipeline_mode = #tpu.pipeline_mode<synchronous>, transform_indices = @transform_16, window_bounds = array<i64: 64, 64>}, {pipeline_mode = #tpu.pipeline_mode<synchronous>, transform_indices = @transform_17, window_bounds = array<i64: 64, 256>}, {pipeline_mode = #tpu.pipeline_mode<synchronous>, transform_indices = @transform_18, window_bounds = array<i64: 256, 256>}, {pipeline_mode = #tpu.pipeline_mode<synchronous>, transform_indices = @transform_19, window_bounds = array<i64: 256, 256>}, {pipeline_mode = #tpu.pipeline_mode<synchronous>, transform_indices = @transform_20, window_bounds = array<i64: 1, 256>}, {pipeline_mode = #tpu.pipeline_mode<synchronous>, transform_indices = @transform_21, window_bounds = array<i64: 256, 128>}, {pipeline_mode = #tpu.pipeline_mode<synchronous>, transform_indices = @transform_22, window_bounds = array<i64: 1, 128>}, {transform_indices = @transform_23, window_bounds = array<i64: 8, 128>}]} {
    %c0 = arith.constant 0 : index
    %c0_0 = arith.constant 0 : index
    %0 = vector.load %arg1[%c0, %c0_0] : memref<8x4xf32, #tpu.memory_space<vmem>>, vector<8x4xf32>
    %c0_1 = arith.constant 0 : index
    %c0_2 = arith.constant 0 : index
    %1 = vector.load %arg3[%c0_1, %c0_2] : memref<4x64xf32, #tpu.memory_space<vmem>>, vector<4x64xf32>
    %cst = arith.constant dense<0.000000e+00> : vector<8x64xf32>
    %2 = tpu.matmul %0, %1, %cst {dimension_numbers = #tpu.dot_dimension_numbers<[1], [0], [0], [1], [0, 0, 1, 1], [], []>} : vector<8x4xf32>, vector<4x64xf32>, vector<8x64xf32> -> vector<8x64xf32>
    %c0_3 = arith.constant 0 : index
    %c0_4 = arith.constant 0 : index
    %3 = vector.load %arg4[%c0_3, %c0_4] : memref<1x64xf32, #tpu.memory_space<vmem>>, vector<1x64xf32>
    %4 = vector.broadcast %3 : vector<1x64xf32> to vector<8x64xf32>
    %5 = arith.addf %2, %4 : vector<8x64xf32>
    %cst_5 = arith.constant 0.000000e+00 : f32
    %6 = vector.broadcast %cst_5 : f32 to vector<8x64xf32>
    %7 = arith.subf %6, %5 : vector<8x64xf32>
    %8 = math.exp %7 : vector<8x64xf32>
    %cst_6 = arith.constant 1.000000e+00 : f32
    %9 = vector.broadcast %cst_6 : f32 to vector<8x64xf32>
    %10 = arith.addf %9, %8 : vector<8x64xf32>
    %cst_7 = arith.constant 1.000000e+00 : f32
    %11 = vector.broadcast %cst_7 : f32 to vector<8x64xf32>
    %12 = arith.divf %11, %10 : vector<8x64xf32>
    %c0_8 = arith.constant 0 : index
    %c0_9 = arith.constant 0 : index
    %13 = vector.load %arg2[%c0_8, %c0_9] : memref<8x8xf32, #tpu.memory_space<vmem>>, vector<8x8xf32>
    %c0_10 = arith.constant 0 : index
    %c0_11 = arith.constant 0 : index
    %14 = vector.load %arg5[%c0_10, %c0_11] : memref<8x32xf32, #tpu.memory_space<vmem>>, vector<8x32xf32>
    %cst_12 = arith.constant dense<0.000000e+00> : vector<8x32xf32>
    %15 = tpu.matmul %13, %14, %cst_12 {dimension_numbers = #tpu.dot_dimension_numbers<[1], [0], [0], [1], [0, 0, 1, 1], [], []>} : vector<8x8xf32>, vector<8x32xf32>, vector<8x32xf32> -> vector<8x32xf32>
    %c0_13 = arith.constant 0 : index
    %c0_14 = arith.constant 0 : index
    %16 = vector.load %arg6[%c0_13, %c0_14] : memref<32x32xf32, #tpu.memory_space<vmem>>, vector<32x32xf32>
    %cst_15 = arith.constant dense<0.000000e+00> : vector<8x32xf32>
    %17 = tpu.matmul %15, %16, %cst_15 {dimension_numbers = #tpu.dot_dimension_numbers<[1], [0], [0], [1], [0, 0, 1, 1], [], []>} : vector<8x32xf32>, vector<32x32xf32>, vector<8x32xf32> -> vector<8x32xf32>
    %18 = arith.subf %15, %17 : vector<8x32xf32>
    %19 = arith.mulf %18, %18 : vector<8x32xf32>
    %cst_16 = arith.constant dense<0.000000e+00> : vector<8x32xf32>
    %20 = tpu.matmul %19, %16, %cst_16 {dimension_numbers = #tpu.dot_dimension_numbers<[1], [0], [0], [1], [0, 0, 1, 1], [], []>} : vector<8x32xf32>, vector<32x32xf32>, vector<8x32xf32> -> vector<8x32xf32>
    %cst_17 = arith.constant 9.99999974E-6 : f32
    %21 = vector.broadcast %cst_17 : f32 to vector<8x32xf32>
    %22 = arith.addf %20, %21 : vector<8x32xf32>
    %23 = math.rsqrt %22 : vector<8x32xf32>
    %24 = arith.mulf %18, %23 : vector<8x32xf32>
    %c0_18 = arith.constant 0 : index
    %c0_19 = arith.constant 0 : index
    %25 = vector.load %arg7[%c0_18, %c0_19] : memref<32x32xf32, #tpu.memory_space<vmem>>, vector<32x32xf32>
    %cst_20 = arith.constant dense<0.000000e+00> : vector<8x32xf32>
    %26 = tpu.matmul %24, %25, %cst_20 {dimension_numbers = #tpu.dot_dimension_numbers<[1], [0], [0], [1], [0, 0, 1, 1], [], []>} : vector<8x32xf32>, vector<32x32xf32>, vector<8x32xf32> -> vector<8x32xf32>
    %c0_21 = arith.constant 0 : index
    %c0_22 = arith.constant 0 : index
    %27 = vector.load %arg8[%c0_21, %c0_22] : memref<1x32xf32, #tpu.memory_space<vmem>>, vector<1x32xf32>
    %28 = vector.broadcast %27 : vector<1x32xf32> to vector<8x32xf32>
    %29 = arith.addf %26, %28 : vector<8x32xf32>
    %cst_23 = arith.constant 0.000000e+00 : f32
    %30 = vector.broadcast %cst_23 : f32 to vector<8x32xf32>
    %31 = arith.subf %30, %29 : vector<8x32xf32>
    %32 = math.exp %31 : vector<8x32xf32>
    %cst_24 = arith.constant 1.000000e+00 : f32
    %33 = vector.broadcast %cst_24 : f32 to vector<8x32xf32>
    %34 = arith.addf %33, %32 : vector<8x32xf32>
    %cst_25 = arith.constant 1.000000e+00 : f32
    %35 = vector.broadcast %cst_25 : f32 to vector<8x32xf32>
    %36 = arith.divf %35, %34 : vector<8x32xf32>
    %c0_26 = arith.constant 0 : index
    %c0_27 = arith.constant 0 : index
    %37 = vector.load %arg9[%c0_26, %c0_27] : memref<64x96xf32, #tpu.memory_space<vmem>>, vector<64x96xf32>
    %cst_28 = arith.constant dense<0.000000e+00> : vector<8x96xf32>
    %38 = tpu.matmul %12, %37, %cst_28 {dimension_numbers = #tpu.dot_dimension_numbers<[1], [0], [0], [1], [0, 0, 1, 1], [], []>} : vector<8x64xf32>, vector<64x96xf32>, vector<8x96xf32> -> vector<8x96xf32>
    %c0_29 = arith.constant 0 : index
    %c0_30 = arith.constant 0 : index
    %39 = vector.load %arg10[%c0_29, %c0_30] : memref<32x96xf32, #tpu.memory_space<vmem>>, vector<32x96xf32>
    %cst_31 = arith.constant dense<0.000000e+00> : vector<8x96xf32>
    %40 = tpu.matmul %36, %39, %cst_31 {dimension_numbers = #tpu.dot_dimension_numbers<[1], [0], [0], [1], [0, 0, 1, 1], [], []>} : vector<8x32xf32>, vector<32x96xf32>, vector<8x96xf32> -> vector<8x96xf32>
    %41 = arith.addf %38, %40 : vector<8x96xf32>
    %c0_32 = arith.constant 0 : index
    %c0_33 = arith.constant 0 : index
    %42 = vector.load %arg11[%c0_32, %c0_33] : memref<96x96xf32, #tpu.memory_space<vmem>>, vector<96x96xf32>
    %cst_34 = arith.constant dense<0.000000e+00> : vector<8x96xf32>
    %43 = tpu.matmul %41, %42, %cst_34 {dimension_numbers = #tpu.dot_dimension_numbers<[1], [0], [0], [1], [0, 0, 1, 1], [], []>} : vector<8x96xf32>, vector<96x96xf32>, vector<8x96xf32> -> vector<8x96xf32>
    %44 = arith.subf %41, %43 : vector<8x96xf32>
    %45 = arith.mulf %44, %44 : vector<8x96xf32>
    %cst_35 = arith.constant dense<0.000000e+00> : vector<8x96xf32>
    %46 = tpu.matmul %45, %42, %cst_35 {dimension_numbers = #tpu.dot_dimension_numbers<[1], [0], [0], [1], [0, 0, 1, 1], [], []>} : vector<8x96xf32>, vector<96x96xf32>, vector<8x96xf32> -> vector<8x96xf32>
    %cst_36 = arith.constant 9.99999974E-6 : f32
    %47 = vector.broadcast %cst_36 : f32 to vector<8x96xf32>
    %48 = arith.addf %46, %47 : vector<8x96xf32>
    %49 = math.rsqrt %48 : vector<8x96xf32>
    %50 = arith.mulf %44, %49 : vector<8x96xf32>
    %c0_37 = arith.constant 0 : index
    %c0_38 = arith.constant 0 : index
    %51 = vector.load %arg12[%c0_37, %c0_38] : memref<96x96xf32, #tpu.memory_space<vmem>>, vector<96x96xf32>
    %cst_39 = arith.constant dense<0.000000e+00> : vector<8x96xf32>
    %52 = tpu.matmul %50, %51, %cst_39 {dimension_numbers = #tpu.dot_dimension_numbers<[1], [0], [0], [1], [0, 0, 1, 1], [], []>} : vector<8x96xf32>, vector<96x96xf32>, vector<8x96xf32> -> vector<8x96xf32>
    %c0_40 = arith.constant 0 : index
    %c0_41 = arith.constant 0 : index
    %53 = vector.load %arg13[%c0_40, %c0_41] : memref<1x96xf32, #tpu.memory_space<vmem>>, vector<1x96xf32>
    %54 = vector.broadcast %53 : vector<1x96xf32> to vector<8x96xf32>
    %55 = arith.addf %52, %54 : vector<8x96xf32>
    %cst_42 = arith.constant 0.000000e+00 : f32
    %56 = vector.broadcast %cst_42 : f32 to vector<8x96xf32>
    %57 = arith.maximumf %55, %56 : vector<8x96xf32>
    %c0_43 = arith.constant 0 : index
    %c0_44 = arith.constant 0 : index
    %58 = vector.load %arg11[%c0_43, %c0_44] : memref<96x96xf32, #tpu.memory_space<vmem>>, vector<96x96xf32>
    %cst_45 = arith.constant dense<0.000000e+00> : vector<8x96xf32>
    %59 = tpu.matmul %57, %58, %cst_45 {dimension_numbers = #tpu.dot_dimension_numbers<[1], [0], [0], [1], [0, 0, 1, 1], [], []>} : vector<8x96xf32>, vector<96x96xf32>, vector<8x96xf32> -> vector<8x96xf32>
    %60 = arith.subf %57, %59 : vector<8x96xf32>
    %61 = arith.mulf %60, %60 : vector<8x96xf32>
    %cst_46 = arith.constant dense<0.000000e+00> : vector<8x96xf32>
    %62 = tpu.matmul %61, %58, %cst_46 {dimension_numbers = #tpu.dot_dimension_numbers<[1], [0], [0], [1], [0, 0, 1, 1], [], []>} : vector<8x96xf32>, vector<96x96xf32>, vector<8x96xf32> -> vector<8x96xf32>
    %cst_47 = arith.constant 9.99999974E-6 : f32
    %63 = vector.broadcast %cst_47 : f32 to vector<8x96xf32>
    %64 = arith.addf %62, %63 : vector<8x96xf32>
    %65 = math.rsqrt %64 : vector<8x96xf32>
    %66 = arith.mulf %60, %65 : vector<8x96xf32>
    %c0_48 = arith.constant 0 : index
    %c0_49 = arith.constant 0 : index
    %67 = vector.load %arg14[%c0_48, %c0_49] : memref<96x24xf32, #tpu.memory_space<vmem>>, vector<96x24xf32>
    %cst_50 = arith.constant dense<0.000000e+00> : vector<8x24xf32>
    %68 = tpu.matmul %66, %67, %cst_50 {dimension_numbers = #tpu.dot_dimension_numbers<[1], [0], [0], [1], [0, 0, 1, 1], [], []>} : vector<8x96xf32>, vector<96x24xf32>, vector<8x24xf32> -> vector<8x24xf32>
    %c0_51 = arith.constant 0 : index
    %c0_52 = arith.constant 0 : index
    %69 = vector.load %arg15[%c0_51, %c0_52] : memref<1x24xf32, #tpu.memory_space<vmem>>, vector<1x24xf32>
    %70 = vector.broadcast %69 : vector<1x24xf32> to vector<8x24xf32>
    %71 = arith.addf %68, %70 : vector<8x24xf32>
    %c0_53 = arith.constant 0 : index
    %c0_54 = arith.constant 0 : index
    %72 = vector.load %arg16[%c0_53, %c0_54] : memref<24x64xf32, #tpu.memory_space<vmem>>, vector<24x64xf32>
    %cst_55 = arith.constant dense<0.000000e+00> : vector<8x64xf32>
    %73 = tpu.matmul %71, %72, %cst_55 {dimension_numbers = #tpu.dot_dimension_numbers<[1], [0], [0], [1], [0, 0, 1, 1], [], []>} : vector<8x24xf32>, vector<24x64xf32>, vector<8x64xf32> -> vector<8x64xf32>
    %cst_56 = arith.constant dense<0xFF800000> : vector<8xf32>
    %74 = vector.multi_reduction <maximumf>, %73, %cst_56 [1] : vector<8x64xf32> to vector<8xf32>
    %75 = vector.shape_cast %74 : vector<8xf32> to vector<8x1xf32>
    %76 = vector.broadcast %75 : vector<8x1xf32> to vector<8x64xf32>
    %77 = arith.subf %73, %76 : vector<8x64xf32>
    %78 = math.exp %77 : vector<8x64xf32>
    %c0_57 = arith.constant 0 : index
    %c0_58 = arith.constant 0 : index
    %79 = vector.load %arg17[%c0_57, %c0_58] : memref<64x64xf32, #tpu.memory_space<vmem>>, vector<64x64xf32>
    %cst_59 = arith.constant dense<0.000000e+00> : vector<8x64xf32>
    %80 = tpu.matmul %78, %79, %cst_59 {dimension_numbers = #tpu.dot_dimension_numbers<[1], [0], [0], [1], [0, 0, 1, 1], [], []>} : vector<8x64xf32>, vector<64x64xf32>, vector<8x64xf32> -> vector<8x64xf32>
    %81 = tpu.reciprocal %80 {approx = true} : vector<8x64xf32> -> vector<8x64xf32>
    %82 = arith.mulf %78, %81 : vector<8x64xf32>
    %c0_60 = arith.constant 0 : index
    %c0_61 = arith.constant 0 : index
    %83 = vector.load %arg18[%c0_60, %c0_61] : memref<64x256xf32, #tpu.memory_space<vmem>>, vector<64x256xf32>
    %cst_62 = arith.constant dense<0.000000e+00> : vector<8x256xf32>
    %84 = tpu.matmul %82, %83, %cst_62 {dimension_numbers = #tpu.dot_dimension_numbers<[1], [0], [0], [1], [0, 0, 1, 1], [], []>} : vector<8x64xf32>, vector<64x256xf32>, vector<8x256xf32> -> vector<8x256xf32>
    %c0_63 = arith.constant 0 : index
    %c0_64 = arith.constant 0 : index
    %85 = vector.load %arg19[%c0_63, %c0_64] : memref<256x256xf32, #tpu.memory_space<vmem>>, vector<256x256xf32>
    %cst_65 = arith.constant dense<0.000000e+00> : vector<8x256xf32>
    %86 = tpu.matmul %84, %85, %cst_65 {dimension_numbers = #tpu.dot_dimension_numbers<[1], [0], [0], [1], [0, 0, 1, 1], [], []>} : vector<8x256xf32>, vector<256x256xf32>, vector<8x256xf32> -> vector<8x256xf32>
    %87 = arith.subf %84, %86 : vector<8x256xf32>
    %88 = arith.mulf %87, %87 : vector<8x256xf32>
    %cst_66 = arith.constant dense<0.000000e+00> : vector<8x256xf32>
    %89 = tpu.matmul %88, %85, %cst_66 {dimension_numbers = #tpu.dot_dimension_numbers<[1], [0], [0], [1], [0, 0, 1, 1], [], []>} : vector<8x256xf32>, vector<256x256xf32>, vector<8x256xf32> -> vector<8x256xf32>
    %cst_67 = arith.constant 9.99999974E-6 : f32
    %90 = vector.broadcast %cst_67 : f32 to vector<8x256xf32>
    %91 = arith.addf %89, %90 : vector<8x256xf32>
    %92 = math.rsqrt %91 : vector<8x256xf32>
    %93 = arith.mulf %87, %92 : vector<8x256xf32>
    %c0_68 = arith.constant 0 : index
    %c0_69 = arith.constant 0 : index
    %94 = vector.load %arg20[%c0_68, %c0_69] : memref<256x256xf32, #tpu.memory_space<vmem>>, vector<256x256xf32>
    %cst_70 = arith.constant dense<0.000000e+00> : vector<8x256xf32>
    %95 = tpu.matmul %93, %94, %cst_70 {dimension_numbers = #tpu.dot_dimension_numbers<[1], [0], [0], [1], [0, 0, 1, 1], [], []>} : vector<8x256xf32>, vector<256x256xf32>, vector<8x256xf32> -> vector<8x256xf32>
    %c0_71 = arith.constant 0 : index
    %c0_72 = arith.constant 0 : index
    %96 = vector.load %arg21[%c0_71, %c0_72] : memref<1x256xf32, #tpu.memory_space<vmem>>, vector<1x256xf32>
    %97 = vector.broadcast %96 : vector<1x256xf32> to vector<8x256xf32>
    %98 = arith.addf %95, %97 : vector<8x256xf32>
    %cst_73 = arith.constant 0.000000e+00 : f32
    %99 = vector.broadcast %cst_73 : f32 to vector<8x256xf32>
    %100 = arith.maximumf %98, %99 : vector<8x256xf32>
    %c0_74 = arith.constant 0 : index
    %c0_75 = arith.constant 0 : index
    %101 = vector.load %arg19[%c0_74, %c0_75] : memref<256x256xf32, #tpu.memory_space<vmem>>, vector<256x256xf32>
    %cst_76 = arith.constant dense<0.000000e+00> : vector<8x256xf32>
    %102 = tpu.matmul %100, %101, %cst_76 {dimension_numbers = #tpu.dot_dimension_numbers<[1], [0], [0], [1], [0, 0, 1, 1], [], []>} : vector<8x256xf32>, vector<256x256xf32>, vector<8x256xf32> -> vector<8x256xf32>
    %103 = arith.subf %100, %102 : vector<8x256xf32>
    %104 = arith.mulf %103, %103 : vector<8x256xf32>
    %cst_77 = arith.constant dense<0.000000e+00> : vector<8x256xf32>
    %105 = tpu.matmul %104, %101, %cst_77 {dimension_numbers = #tpu.dot_dimension_numbers<[1], [0], [0], [1], [0, 0, 1, 1], [], []>} : vector<8x256xf32>, vector<256x256xf32>, vector<8x256xf32> -> vector<8x256xf32>
    %cst_78 = arith.constant 9.99999974E-6 : f32
    %106 = vector.broadcast %cst_78 : f32 to vector<8x256xf32>
    %107 = arith.addf %105, %106 : vector<8x256xf32>
    %108 = math.rsqrt %107 : vector<8x256xf32>
    %109 = arith.mulf %103, %108 : vector<8x256xf32>
    %c0_79 = arith.constant 0 : index
    %c0_80 = arith.constant 0 : index
    %110 = vector.load %arg22[%c0_79, %c0_80] : memref<256x128xf32, #tpu.memory_space<vmem>>, vector<256x128xf32>
    %cst_81 = arith.constant dense<0.000000e+00> : vector<8x128xf32>
    %111 = tpu.matmul %109, %110, %cst_81 {dimension_numbers = #tpu.dot_dimension_numbers<[1], [0], [0], [1], [0, 0, 1, 1], [], []>} : vector<8x256xf32>, vector<256x128xf32>, vector<8x128xf32> -> vector<8x128xf32>
    %c0_82 = arith.constant 0 : index
    %c0_83 = arith.constant 0 : index
    %112 = vector.load %arg23[%c0_82, %c0_83] : memref<1x128xf32, #tpu.memory_space<vmem>>, vector<1x128xf32>
    %113 = vector.broadcast %112 : vector<1x128xf32> to vector<8x128xf32>
    %114 = arith.addf %111, %113 : vector<8x128xf32>
    %c0_84 = arith.constant 0 : index
    %c0_85 = arith.constant 0 : index
    %115 = vector.load %arg24[%c0_84, %c0_85] : memref<8x128xf32, #tpu.memory_space<vmem>>, vector<8x128xf32>
    tpu.vector_store %arg24[%c0_84, %c0_85], %114 {strides = array<i32>} : memref<8x128xf32, #tpu.memory_space<vmem>>, vector<8x128xf32>,
    return
  }
  func.func @transform_0(%arg0: i32) -> (i32, i32) {
    %c0_i32 = arith.constant 0 : i32
    %c0_i32_0 = arith.constant 0 : i32
    return %arg0, %c0_i32 : i32, i32
  }
  func.func @transform_1(%arg0: i32) -> (i32, i32) {
    %c0_i32 = arith.constant 0 : i32
    %c0_i32_0 = arith.constant 0 : i32
    return %arg0, %c0_i32 : i32, i32
  }
  func.func @transform_2(%arg0: i32) -> (i32, i32) {
    %c0_i32 = arith.constant 0 : i32
    %c0_i32_0 = arith.constant 0 : i32
    %c0_i32_1 = arith.constant 0 : i32
    return %c0_i32, %c0_i32_0 : i32, i32
  }
  func.func @transform_3(%arg0: i32) -> (i32, i32) {
    %c0_i32 = arith.constant 0 : i32
    %c0_i32_0 = arith.constant 0 : i32
    %c0_i32_1 = arith.constant 0 : i32
    return %c0_i32, %c0_i32_0 : i32, i32
  }
  func.func @transform_4(%arg0: i32) -> (i32, i32) {
    %c0_i32 = arith.constant 0 : i32
    %c0_i32_0 = arith.constant 0 : i32
    %c0_i32_1 = arith.constant 0 : i32
    return %c0_i32, %c0_i32_0 : i32, i32
  }
  func.func @transform_5(%arg0: i32) -> (i32, i32) {
    %c0_i32 = arith.constant 0 : i32
    %c0_i32_0 = arith.constant 0 : i32
    %c0_i32_1 = arith.constant 0 : i32
    return %c0_i32, %c0_i32_0 : i32, i32
  }
  func.func @transform_6(%arg0: i32) -> (i32, i32) {
    %c0_i32 = arith.constant 0 : i32
    %c0_i32_0 = arith.constant 0 : i32
    %c0_i32_1 = arith.constant 0 : i32
    return %c0_i32, %c0_i32_0 : i32, i32
  }
  func.func @transform_7(%arg0: i32) -> (i32, i32) {
    %c0_i32 = arith.constant 0 : i32
    %c0_i32_0 = arith.constant 0 : i32
    %c0_i32_1 = arith.constant 0 : i32
    return %c0_i32, %c0_i32_0 : i32, i32
  }
  func.func @transform_8(%arg0: i32) -> (i32, i32) {
    %c0_i32 = arith.constant 0 : i32
    %c0_i32_0 = arith.constant 0 : i32
    %c0_i32_1 = arith.constant 0 : i32
    return %c0_i32, %c0_i32_0 : i32, i32
  }
  func.func @transform_9(%arg0: i32) -> (i32, i32) {
    %c0_i32 = arith.constant 0 : i32
    %c0_i32_0 = arith.constant 0 : i32
    %c0_i32_1 = arith.constant 0 : i32
    return %c0_i32, %c0_i32_0 : i32, i32
  }
  func.func @transform_10(%arg0: i32) -> (i32, i32) {
    %c0_i32 = arith.constant 0 : i32
    %c0_i32_0 = arith.constant 0 : i32
    %c0_i32_1 = arith.constant 0 : i32
    return %c0_i32, %c0_i32_0 : i32, i32
  }
  func.func @transform_11(%arg0: i32) -> (i32, i32) {
    %c0_i32 = arith.constant 0 : i32
    %c0_i32_0 = arith.constant 0 : i32
    %c0_i32_1 = arith.constant 0 : i32
    return %c0_i32, %c0_i32_0 : i32, i32
  }
  func.func @transform_12(%arg0: i32) -> (i32, i32) {
    %c0_i32 = arith.constant 0 : i32
    %c0_i32_0 = arith.constant 0 : i32
    %c0_i32_1 = arith.constant 0 : i32
    return %c0_i32, %c0_i32_0 : i32, i32
  }
  func.func @transform_13(%arg0: i32) -> (i32, i32) {
    %c0_i32 = arith.constant 0 : i32
    %c0_i32_0 = arith.constant 0 : i32
    %c0_i32_1 = arith.constant 0 : i32
    return %c0_i32, %c0_i32_0 : i32, i32
  }
  func.func @transform_14(%arg0: i32) -> (i32, i32) {
    %c0_i32 = arith.constant 0 : i32
    %c0_i32_0 = arith.constant 0 : i32
    %c0_i32_1 = arith.constant 0 : i32
    return %c0_i32, %c0_i32_0 : i32, i32
  }
  func.func @transform_15(%arg0: i32) -> (i32, i32) {
    %c0_i32 = arith.constant 0 : i32
    %c0_i32_0 = arith.constant 0 : i32
    %c0_i32_1 = arith.constant 0 : i32
    return %c0_i32, %c0_i32_0 : i32, i32
  }
  func.func @transform_16(%arg0: i32) -> (i32, i32) {
    %c0_i32 = arith.constant 0 : i32
    %c0_i32_0 = arith.constant 0 : i32
    %c0_i32_1 = arith.constant 0 : i32
    return %c0_i32, %c0_i32_0 : i32, i32
  }
  func.func @transform_17(%arg0: i32) -> (i32, i32) {
    %c0_i32 = arith.constant 0 : i32
    %c0_i32_0 = arith.constant 0 : i32
    %c0_i32_1 = arith.constant 0 : i32
    return %c0_i32, %c0_i32_0 : i32, i32
  }
  func.func @transform_18(%arg0: i32) -> (i32, i32) {
    %c0_i32 = arith.constant 0 : i32
    %c0_i32_0 = arith.constant 0 : i32
    %c0_i32_1 = arith.constant 0 : i32
    return %c0_i32, %c0_i32_0 : i32, i32
  }
  func.func @transform_19(%arg0: i32) -> (i32, i32) {
    %c0_i32 = arith.constant 0 : i32
    %c0_i32_0 = arith.constant 0 : i32
    %c0_i32_1 = arith.constant 0 : i32
    return %c0_i32, %c0_i32_0 : i32, i32
  }
  func.func @transform_20(%arg0: i32) -> (i32, i32) {
    %c0_i32 = arith.constant 0 : i32
    %c0_i32_0 = arith.constant 0 : i32
    %c0_i32_1 = arith.constant 0 : i32
    return %c0_i32, %c0_i32_0 : i32, i32
  }
  func.func @transform_21(%arg0: i32) -> (i32, i32) {
    %c0_i32 = arith.constant 0 : i32
    %c0_i32_0 = arith.constant 0 : i32
    %c0_i32_1 = arith.constant 0 : i32
    return %c0_i32, %c0_i32_0 : i32, i32
  }
  func.func @transform_22(%arg0: i32) -> (i32, i32) {
    %c0_i32 = arith.constant 0 : i32
    %c0_i32_0 = arith.constant 0 : i32
    %c0_i32_1 = arith.constant 0 : i32
    return %c0_i32, %c0_i32_0 : i32, i32
  }
  func.func @transform_23(%arg0: i32) -> (i32, i32) {
    %c0_i32 = arith.constant 0 : i32
    %c0_i32_0 = arith.constant 0 : i32
    return %arg0, %c0_i32 : i32, i32
  }
}

</mosaic_0001>

<llo_original>
// kernel: tpu_custom_call.1
$region0: #{tpu_custom_call.1}
  #allocation0 [shape = 'u32[]', space=smem, size = 0x4, offset = 0x4, fixed_abs, tag = 'smem constant byte address 0x4 - core index']
  #allocation1 [shape = 'u32[144,128]{1,0:T(1,128)}', space=vmem, size = 0x12000, scoped, tag = 'internal scratch']
  %s0 = inlined_call_operand.vmem [shape: f32[8,4], index: 0, kind: input, shape index: {}]
  %s1 = inlined_call_operand.hbm [shape: f32[8,8], index: 1, kind: input, shape index: {}]
  %s2 = inlined_call_operand.vmem [shape: f32[4,64], index: 2, kind: input, shape index: {}]
  %s3 = inlined_call_operand.hbm [shape: f32[1,64], index: 3, kind: input, shape index: {}]
  %s4 = inlined_call_operand.hbm [shape: f32[8,32], index: 4, kind: input, shape index: {}]
  %s5 = inlined_call_operand.hbm [shape: f32[32,32], index: 5, kind: input, shape index: {}]
  %s6 = inlined_call_operand.hbm [shape: f32[32,32], index: 6, kind: input, shape index: {}]
  %s7 = inlined_call_operand.hbm [shape: f32[1,32], index: 7, kind: input, shape index: {}]
  %s8 = inlined_call_operand.vmem [shape: f32[64,96], index: 8, kind: input, shape index: {}]
  %s9 = inlined_call_operand.hbm [shape: f32[32,96], index: 9, kind: input, shape index: {}]
  %s10 = inlined_call_operand.hbm [shape: f32[96,96], index: 10, kind: input, shape index: {}]
  %s11 = inlined_call_operand.hbm [shape: f32[96,96], index: 11, kind: input, shape index: {}]
  %s12 = inlined_call_operand.hbm [shape: f32[1,96], index: 12, kind: input, shape index: {}]
  %s13 = inlined_call_operand.vmem [shape: f32[96,24], index: 13, kind: input, shape index: {}]
  %s14 = inlined_call_operand.hbm [shape: f32[1,24], index: 14, kind: input, shape index: {}]
  %s15 = inlined_call_operand.hbm [shape: f32[24,64], index: 15, kind: input, shape index: {}]
  %s16 = inlined_call_operand.hbm [shape: f32[64,64], index: 16, kind: input, shape index: {}]
  %s17 = inlined_call_operand.vmem [shape: f32[64,256], index: 17, kind: input, shape index: {}]
  %s18 = inlined_call_operand.hbm [shape: f32[256,256], index: 18, kind: input, shape index: {}]
  %s19 = inlined_call_operand.hbm [shape: f32[256,256], index: 19, kind: input, shape index: {}]
  %s20 = inlined_call_operand.vmem [shape: f32[1,256], index: 20, kind: input, shape index: {}]
  %s21 = inlined_call_operand.hbm [shape: f32[256,128], index: 21, kind: input, shape index: {}]
  %s22 = inlined_call_operand.vmem [shape: f32[1,128], index: 22, kind: input, shape index: {}]
  %s23 = inlined_call_operand.hbm [shape: f32[8,128], index: 23, kind: output, shape index: {}]
  %s24 = sld [smem:[#allocation0]]
  $region166: #{tpu_custom_call.1} parent=0
    _
  %s26 = ssub.s32 1, %s24
  %s27 = scalar_select 0, %s26, %s24
  $region1: #{tpu_custom_call.1} parent=0
    #allocation2 [shape = 'u8[4096]{0}', space=vmem, size = 0x1000, scoped, tag = 'input window, operand 1, single buffered']
    #allocation3 [shape = 's32[1]{0}', space=sflag, size = 0x4, scoped, tag = 'scoped memory for tpu_custom_call.1']
    #allocation4 [shape = 's32[1]{0}', space=sflag, size = 0x4, scoped, tag = 'scoped memory for tpu_custom_call.1']
    #allocation5 [shape = 'u8[512]{0}', space=vmem, size = 0x400, scoped, tag = 'input window, operand 3, single buffered']
    #allocation6 [shape = 's32[1]{0}', space=sflag, size = 0x4, scoped, tag = 'scoped memory for tpu_custom_call.1']
    #allocation7 [shape = 'u8[4096]{0}', space=vmem, size = 0x1000, scoped, tag = 'input window, operand 4, single buffered']
    #allocation8 [shape = 'u8[16384]{0}', space=vmem, size = 0x4000, scoped, tag = 'input window, operand 5, single buffered']
    #allocation9 [shape = 's32[1]{0}', space=sflag, size = 0x4, scoped, tag = 'scoped memory for tpu_custom_call.1']
    #allocation10 [shape = 'u8[16384]{0}', space=vmem, size = 0x4000, scoped, tag = 'input window, operand 6, single buffered']
    #allocation11 [shape = 'u8[512]{0}', space=vmem, size = 0x400, scoped, tag = 'input window, operand 7, single buffered']
    #allocation12 [shape = 's32[1]{0}', space=sflag, size = 0x4, scoped, tag = 'scoped memory for tpu_custom_call.1']
    #allocation13 [shape = 'u8[16384]{0}', space=vmem, size = 0x4000, scoped, tag = 'input window, operand 9, single buffered']
    #allocation14 [shape = 'u8[49152]{0}', space=vmem, size = 0xc000, scoped, tag = 'input window, operand 10, single buffered']
    #allocation15 [shape = 's32[1]{0}', space=sflag, size = 0x4, scoped, tag = 'scoped memory for tpu_custom_call.1']
    #allocation16 [shape = 'u8[49152]{0}', space=vmem, size = 0xc000, scoped, tag = 'input window, operand 11, single buffered']
    #allocation17 [shape = 'u8[512]{0}', space=vmem, size = 0x400, scoped, tag = 'input window, operand 12, single buffered']
    #allocation18 [shape = 's32[1]{0}', space=sflag, size = 0x4, scoped, tag = 'scoped memory for tpu_custom_call.1']
    #allocation19 [shape = 'u8[512]{0}', space=vmem, size = 0x400, scoped, tag = 'input window, operand 14, single buffered']
    #allocation20 [shape = 'u8[12288]{0}', space=vmem, size = 0x3000, scoped, tag = 'input window, operand 15, single buffered']
    #allocation21 [shape = 's32[1]{0}', space=sflag, size = 0x4, scoped, tag = 'scoped memory for tpu_custom_call.1']
    #allocation22 [shape = 'u8[32768]{0}', space=vmem, size = 0x8000, scoped, tag = 'input window, operand 16, single buffered']
    #allocation23 [shape = 'u8[262144]{0}', space=vmem, size = 0x40000, scoped, tag = 'input window, operand 18, single buffered']
    #allocation24 [shape = 's32[1]{0}', space=sflag, size = 0x4, scoped, tag = 'scoped memory for tpu_custom_call.1']
    #allocation25 [shape = 'u8[262144]{0}', space=vmem, size = 0x40000, scoped, tag = 'input window, operand 19, single buffered']
    #allocation26 [shape = 'u8[131072]{0}', space=vmem, size = 0x20000, scoped, tag = 'input window, operand 21, single buffered']
    #allocation27 [shape = 's32[1]{0}', space=sflag, size = 0x4, scoped, tag = 'scoped memory for tpu_custom_call.1']
    #allocation28 [shape = 'u8[4096]{0}', space=vmem, size = 0x1000, scoped, tag = 'output window, operand 0, single buffered']
    %28 = vsyncpa [#allocation3], 0
    %29 = vsyncpa [#allocation6], 0
    %30 = vsyncpa [#allocation9], 0
    %31 = vsyncpa [#allocation12], 0
    %32 = vsyncpa [#allocation15], 0
    %33 = vsyncpa [#allocation18], 0
    %34 = vsyncpa [#allocation21], 0
    %35 = vsyncpa [#allocation24], 0
    %36 = vsyncpa [#allocation27], 0
    %37 = vsyncpa [#allocation4], 0
    // Predicated region
    $region2: #{tpu_custom_call.1} parent=1 // pred_check
      _
    $region3: #{tpu_custom_call.1} parent=1 // pred_check_branch
      %39 = sbr.rel (0) target = $region5
    $region4: #{tpu_custom_call.1} parent=1 // pred_region
      _
    $region5: #{tpu_custom_call.1} parent=1 // pred_fallthru
      _
    // Predicated region
    $region6: #{tpu_custom_call.1} parent=1 // pred_check
      _
    $region7: #{tpu_custom_call.1} parent=1 // pred_check_branch
      %41 = sbr.rel (0) target = $region9
    $region8: #{tpu_custom_call.1} parent=1 // pred_region
      %s43 = ssub.s32 128, 128
      %44 = vsyncadd [#allocation3], %s43
      %s46 = sshll.u32 [#allocation2], 4
      %s47 = int_to_ptr.vmem [resolvable:$true] %s46
      %49 = dma.hbm_to_vmem [thread:$0]  %s1, 128, %s47, [#allocation3]
    $region9: #{tpu_custom_call.1} parent=1 // pred_fallthru
      _
    // Predicated region
    $region10: #{tpu_custom_call.1} parent=1 // pred_check
      _
    $region11: #{tpu_custom_call.1} parent=1 // pred_check_branch
      %51 = sbr.rel (0) target = $region13
    $region12: #{tpu_custom_call.1} parent=1 // pred_region
      _
    $region13: #{tpu_custom_call.1} parent=1 // pred_fallthru
      _
    // Predicated region
    $region14: #{tpu_custom_call.1} parent=1 // pred_check
      _
    $region15: #{tpu_custom_call.1} parent=1 // pred_check_branch
      %53 = sbr.rel (0) target = $region17
    $region16: #{tpu_custom_call.1} parent=1 // pred_region
      %s55 = ssub.s32 16, 16
      %56 = vsyncadd [#allocation6], %s55
      %s58 = sshll.u32 [#allocation5], 4
      %s59 = int_to_ptr.vmem [resolvable:$true] %s58
      %61 = dma.hbm_to_vmem [thread:$0]  %s3, 16, %s59, [#allocation6]
    $region17: #{tpu_custom_call.1} parent=1 // pred_fallthru
      _
    // Predicated region
    $region18: #{tpu_custom_call.1} parent=1 // pred_check
      _
    $region19: #{tpu_custom_call.1} parent=1 // pred_check_branch
      %63 = sbr.rel (0) target = $region21
    $region20: #{tpu_custom_call.1} parent=1 // pred_region
      %s65 = ssub.s32 128, 128
      %66 = vsyncadd [#allocation6], %s65
      %s68 = sshll.u32 [#allocation7], 4
      %s69 = int_to_ptr.vmem [resolvable:$true] %s68
      %71 = dma.hbm_to_vmem [thread:$0]  %s4, 128, %s69, [#allocation6]
    $region21: #{tpu_custom_call.1} parent=1 // pred_fallthru
      _
    // Predicated region
    $region22: #{tpu_custom_call.1} parent=1 // pred_check
      _
    $region23: #{tpu_custom_call.1} parent=1 // pred_check_branch
      %73 = sbr.rel (0) target = $region25
    $region24: #{tpu_custom_call.1} parent=1 // pred_region
      %s75 = ssub.s32 512, 512
      %76 = vsyncadd [#allocation9], %s75
      %s77 = sshll.u32 [#allocation8], 4
      %s78 = int_to_ptr.vmem [resolvable:$true] %s77
      %83 = dma.hbm_to_vmem [thread:$0]  %s5, 512, %s78, [#allocation9], 128, 128, 8
    $region25: #{tpu_custom_call.1} parent=1 // pred_fallthru
      _
    // Predicated region
    $region26: #{tpu_custom_call.1} parent=1 // pred_check
      _
    $region27: #{tpu_custom_call.1} parent=1 // pred_check_branch
      %85 = sbr.rel (0) target = $region29
    $region28: #{tpu_custom_call.1} parent=1 // pred_region
      %s87 = ssub.s32 512, 512
      %88 = vsyncadd [#allocation9], %s87
      %s89 = sshll.u32 [#allocation10], 4
      %s90 = int_to_ptr.vmem [resolvable:$true] %s89
      %95 = dma.hbm_to_vmem [thread:$0]  %s6, 512, %s90, [#allocation9], 128, 128, 8
    $region29: #{tpu_custom_call.1} parent=1 // pred_fallthru
      _
    // Predicated region
    $region30: #{tpu_custom_call.1} parent=1 // pred_check
      _
    $region31: #{tpu_custom_call.1} parent=1 // pred_check_branch
      %97 = sbr.rel (0) target = $region33
    $region32: #{tpu_custom_call.1} parent=1 // pred_region
      %s99 = ssub.s32 16, 16
      %100 = vsyncadd [#allocation12], %s99
      %s102 = sshll.u32 [#allocation11], 4
      %s103 = int_to_ptr.vmem [resolvable:$true] %s102
      %105 = dma.hbm_to_vmem [thread:$0]  %s7, 16, %s103, [#allocation12]
    $region33: #{tpu_custom_call.1} parent=1 // pred_fallthru
      _
    // Predicated region
    $region34: #{tpu_custom_call.1} parent=1 // pred_check
      _
    $region35: #{tpu_custom_call.1} parent=1 // pred_check_branch
      %107 = sbr.rel (0) target = $region37
    $region36: #{tpu_custom_call.1} parent=1 // pred_region
      _
    $region37: #{tpu_custom_call.1} parent=1 // pred_fallthru
      _
    // Predicated region
    $region38: #{tpu_custom_call.1} parent=1 // pred_check
      _
    $region39: #{tpu_custom_call.1} parent=1 // pred_check_branch
      %109 = sbr.rel (0) target = $region41
    $region40: #{tpu_custom_call.1} parent=1 // pred_region
      %s111 = ssub.s32 512, 512
      %112 = vsyncadd [#allocation12], %s111
      %s113 = sshll.u32 [#allocation13], 4
      %s114 = int_to_ptr.vmem [resolvable:$true] %s113
      %119 = dma.hbm_to_vmem [thread:$0]  %s9, 512, %s114, [#allocation12], 128, 128, 8
    $region41: #{tpu_custom_call.1} parent=1 // pred_fallthru
      _
    // Predicated region
    $region42: #{tpu_custom_call.1} parent=1 // pred_check
      _
    $region43: #{tpu_custom_call.1} parent=1 // pred_check_branch
      %121 = sbr.rel (0) target = $region45
    $region44: #{tpu_custom_call.1} parent=1 // pred_region
      %s123 = ssub.s32 1536, 1536
      %124 = vsyncadd [#allocation15], %s123
      %s125 = sshll.u32 [#allocation14], 4
      %s126 = int_to_ptr.vmem [resolvable:$true] %s125
      %131 = dma.hbm_to_vmem [thread:$0]  %s10, 1536, %s126, [#allocation15], 128, 128, 8
    $region45: #{tpu_custom_call.1} parent=1 // pred_fallthru
      _
    // Predicated region
    $region46: #{tpu_custom_call.1} parent=1 // pred_check
      _
    $region47: #{tpu_custom_call.1} parent=1 // pred_check_branch
      %133 = sbr.rel (0) target = $region49
    $region48: #{tpu_custom_call.1} parent=1 // pred_region
      %s135 = ssub.s32 1536, 1536
      %136 = vsyncadd [#allocation15], %s135
      %s137 = sshll.u32 [#allocation16], 4
      %s138 = int_to_ptr.vmem [resolvable:$true] %s137
      %143 = dma.hbm_to_vmem [thread:$0]  %s11, 1536, %s138, [#allocation15], 128, 128, 8
    $region49: #{tpu_custom_call.1} parent=1 // pred_fallthru
      _
    // Predicated region
    $region50: #{tpu_custom_call.1} parent=1 // pred_check
      _
    $region51: #{tpu_custom_call.1} parent=1 // pred_check_branch
      %145 = sbr.rel (0) target = $region53
    $region52: #{tpu_custom_call.1} parent=1 // pred_region
      %s147 = ssub.s32 16, 16
      %148 = vsyncadd [#allocation18], %s147
      %s150 = sshll.u32 [#allocation17], 4
      %s151 = int_to_ptr.vmem [resolvable:$true] %s150
      %153 = dma.hbm_to_vmem [thread:$0]  %s12, 16, %s151, [#allocation18]
    $region53: #{tpu_custom_call.1} parent=1 // pred_fallthru
      _
    // Predicated region
    $region54: #{tpu_custom_call.1} parent=1 // pred_check
      _
    $region55: #{tpu_custom_call.1} parent=1 // pred_check_branch
      %155 = sbr.rel (0) target = $region57
    $region56: #{tpu_custom_call.1} parent=1 // pred_region
      _
    $region57: #{tpu_custom_call.1} parent=1 // pred_fallthru
      _
    // Predicated region
    $region58: #{tpu_custom_call.1} parent=1 // pred_check
      _
    $region59: #{tpu_custom_call.1} parent=1 // pred_check_branch
      %157 = sbr.rel (0) target = $region61
    $region60: #{tpu_custom_call.1} parent=1 // pred_region
      %s159 = ssub.s32 16, 16
      %160 = vsyncadd [#allocation18], %s159
      %s162 = sshll.u32 [#allocation19], 4
      %s163 = int_to_ptr.vmem [resolvable:$true] %s162
      %165 = dma.hbm_to_vmem [thread:$0]  %s14, 16, %s163, [#allocation18]
    $region61: #{tpu_custom_call.1} parent=1 // pred_fallthru
      _
    // Predicated region
    $region62: #{tpu_custom_call.1} parent=1 // pred_check
      _
    $region63: #{tpu_custom_call.1} parent=1 // pred_check_branch
      %167 = sbr.rel (0) target = $region65
    $region64: #{tpu_custom_call.1} parent=1 // pred_region
      %s169 = ssub.s32 384, 384
      %170 = vsyncadd [#allocation21], %s169
      %s171 = sshll.u32 [#allocation20], 4
      %s172 = int_to_ptr.vmem [resolvable:$true] %s171
      %177 = dma.hbm_to_vmem [thread:$0]  %s15, 384, %s172, [#allocation21], 128, 128, 8
    $region65: #{tpu_custom_call.1} parent=1 // pred_fallthru
      _
    // Predicated region
    $region66: #{tpu_custom_call.1} parent=1 // pred_check
      _
    $region67: #{tpu_custom_call.1} parent=1 // pred_check_branch
      %179 = sbr.rel (0) target = $region69
    $region68: #{tpu_custom_call.1} parent=1 // pred_region
      %s181 = ssub.s32 1024, 1024
      %182 = vsyncadd [#allocation21], %s181
      %s183 = sshll.u32 [#allocation22], 4
      %s184 = int_to_ptr.vmem [resolvable:$true] %s183
      %189 = dma.hbm_to_vmem [thread:$0]  %s16, 1024, %s184, [#allocation21], 128, 128, 8
    $region69: #{tpu_custom_call.1} parent=1 // pred_fallthru
      _
    // Predicated region
    $region70: #{tpu_custom_call.1} parent=1 // pred_check
      _
    $region71: #{tpu_custom_call.1} parent=1 // pred_check_branch
      %191 = sbr.rel (0) target = $region73
    $region72: #{tpu_custom_call.1} parent=1 // pred_region
      _
    $region73: #{tpu_custom_call.1} parent=1 // pred_fallthru
      _
    // Predicated region
    $region74: #{tpu_custom_call.1} parent=1 // pred_check
      _
    $region75: #{tpu_custom_call.1} parent=1 // pred_check_branch
      %193 = sbr.rel (0) target = $region77
    $region76: #{tpu_custom_call.1} parent=1 // pred_region
      %s195 = ssub.s32 8192, 8192
      %196 = vsyncadd [#allocation24], %s195
      %s197 = sshll.u32 [#allocation23], 4
      %s198 = int_to_ptr.vmem [resolvable:$true] %s197
      %203 = dma.hbm_to_vmem [thread:$0]  %s18, 8192, %s198, [#allocation24], 256, 256, 16
    $region77: #{tpu_custom_call.1} parent=1 // pred_fallthru
      _
    // Predicated region
    $region78: #{tpu_custom_call.1} parent=1 // pred_check
      _
    $region79: #{tpu_custom_call.1} parent=1 // pred_check_branch
      %205 = sbr.rel (0) target = $region81
    $region80: #{tpu_custom_call.1} parent=1 // pred_region
      %s207 = ssub.s32 8192, 8192
      %208 = vsyncadd [#allocation24], %s207
      %s209 = sshll.u32 [#allocation25], 4
      %s210 = int_to_ptr.vmem [resolvable:$true] %s209
      %215 = dma.hbm_to_vmem [thread:$0]  %s19, 8192, %s210, [#allocation24], 256, 256, 16
    $region81: #{tpu_custom_call.1} parent=1 // pred_fallthru
      _
    // Predicated region
    $region82: #{tpu_custom_call.1} parent=1 // pred_check
      _
    $region83: #{tpu_custom_call.1} parent=1 // pred_check_branch
      %217 = sbr.rel (0) target = $region85
    $region84: #{tpu_custom_call.1} parent=1 // pred_region
      _
    $region85: #{tpu_custom_call.1} parent=1 // pred_fallthru
      _
    // Predicated region
    $region86: #{tpu_custom_call.1} parent=1 // pred_check
      _
    $region87: #{tpu_custom_call.1} parent=1 // pred_check_branch
      %219 = sbr.rel (0) target = $region89
    $region88: #{tpu_custom_call.1} parent=1 // pred_region
      %s221 = ssub.s32 4096, 4096
      %222 = vsyncadd [#allocation27], %s221
      %s223 = sshll.u32 [#allocation26], 4
      %s224 = int_to_ptr.vmem [resolvable:$true] %s223
      %229 = dma.hbm_to_vmem [thread:$0]  %s21, 4096, %s224, [#allocation27], 128, 128, 8
    $region89: #{tpu_custom_call.1} parent=1 // pred_fallthru
      _
    // Predicated region
    $region90: #{tpu_custom_call.1} parent=1 // pred_check
      _
    $region91: #{tpu_custom_call.1} parent=1 // pred_check_branch
      %231 = sbr.rel (0) target = $region93
    $region92: #{tpu_custom_call.1} parent=1 // pred_region
      _
    $region93: #{tpu_custom_call.1} parent=1 // pred_fallthru
      _
    // Predicated region
    $region94: #{tpu_custom_call.1} parent=1 // pred_check
      _
    $region95: #{tpu_custom_call.1} parent=1 // pred_check_branch
      %233 = sbr.rel (0) target = $region97
    $region96: #{tpu_custom_call.1} parent=1 // pred_region
      %234 = dma.done [#allocation3], 128
    $region97: #{tpu_custom_call.1} parent=1 // pred_fallthru
      _
    // Predicated region
    $region98: #{tpu_custom_call.1} parent=1 // pred_check
      _
    $region99: #{tpu_custom_call.1} parent=1 // pred_check_branch
      %236 = sbr.rel (0) target = $region101
    $region100: #{tpu_custom_call.1} parent=1 // pred_region
      %237 = dma.done [#allocation6], 16
    $region101: #{tpu_custom_call.1} parent=1 // pred_fallthru
      _
    // Predicated region
    $region102: #{tpu_custom_call.1} parent=1 // pred_check
      _
    $region103: #{tpu_custom_call.1} parent=1 // pred_check_branch
      %239 = sbr.rel (0) target = $region105
    $region104: #{tpu_custom_call.1} parent=1 // pred_region
      %240 = dma.done [#allocation6], 128
    $region105: #{tpu_custom_call.1} parent=1 // pred_fallthru
      _
    // Predicated region
    $region106: #{tpu_custom_call.1} parent=1 // pred_check
      _
    $region107: #{tpu_custom_call.1} parent=1 // pred_check_branch
      %242 = sbr.rel (0) target = $region109
    $region108: #{tpu_custom_call.1} parent=1 // pred_region
      %243 = dma.done [#allocation9], 512
    $region109: #{tpu_custom_call.1} parent=1 // pred_fallthru
      _
    // Predicated region
    $region110: #{tpu_custom_call.1} parent=1 // pred_check
      _
    $region111: #{tpu_custom_call.1} parent=1 // pred_check_branch
      %245 = sbr.rel (0) target = $region113
    $region112: #{tpu_custom_call.1} parent=1 // pred_region
      %246 = dma.done [#allocation9], 512
    $region113: #{tpu_custom_call.1} parent=1 // pred_fallthru
      _
    // Predicated region
    $region114: #{tpu_custom_call.1} parent=1 // pred_check
      _
    $region115: #{tpu_custom_call.1} parent=1 // pred_check_branch
      %248 = sbr.rel (0) target = $region117
    $region116: #{tpu_custom_call.1} parent=1 // pred_region
      %249 = dma.done [#allocation12], 16
    $region117: #{tpu_custom_call.1} parent=1 // pred_fallthru
      _
    // Predicated region
    $region118: #{tpu_custom_call.1} parent=1 // pred_check
      _
    $region119: #{tpu_custom_call.1} parent=1 // pred_check_branch
      %251 = sbr.rel (0) target = $region121
    $region120: #{tpu_custom_call.1} parent=1 // pred_region
      %252 = dma.done [#allocation12], 512
    $region121: #{tpu_custom_call.1} parent=1 // pred_fallthru
      _
    // Predicated region
    $region122: #{tpu_custom_call.1} parent=1 // pred_check
      _
    $region123: #{tpu_custom_call.1} parent=1 // pred_check_branch
      %254 = sbr.rel (0) target = $region125
    $region124: #{tpu_custom_call.1} parent=1 // pred_region
      %255 = dma.done [#allocation15], 1536
    $region125: #{tpu_custom_call.1} parent=1 // pred_fallthru
      _
    // Predicated region
    $region126: #{tpu_custom_call.1} parent=1 // pred_check
      _
    $region127: #{tpu_custom_call.1} parent=1 // pred_check_branch
      %257 = sbr.rel (0) target = $region129
    $region128: #{tpu_custom_call.1} parent=1 // pred_region
      %258 = dma.done [#allocation15], 1536
    $region129: #{tpu_custom_call.1} parent=1 // pred_fallthru
      _
    // Predicated region
    $region130: #{tpu_custom_call.1} parent=1 // pred_check
      _
    $region131: #{tpu_custom_call.1} parent=1 // pred_check_branch
      %260 = sbr.rel (0) target = $region133
    $region132: #{tpu_custom_call.1} parent=1 // pred_region
      %261 = dma.done [#allocation18], 16
    $region133: #{tpu_custom_call.1} parent=1 // pred_fallthru
      _
    // Predicated region
    $region134: #{tpu_custom_call.1} parent=1 // pred_check
      _
    $region135: #{tpu_custom_call.1} parent=1 // pred_check_branch
      %263 = sbr.rel (0) target = $region137
    $region136: #{tpu_custom_call.1} parent=1 // pred_region
      %264 = dma.done [#allocation18], 16
    $region137: #{tpu_custom_call.1} parent=1 // pred_fallthru
      _
    // Predicated region
    $region138: #{tpu_custom_call.1} parent=1 // pred_check
      _
    $region139: #{tpu_custom_call.1} parent=1 // pred_check_branch
      %266 = sbr.rel (0) target = $region141
    $region140: #{tpu_custom_call.1} parent=1 // pred_region
      %267 = dma.done [#allocation21], 384
    $region141: #{tpu_custom_call.1} parent=1 // pred_fallthru
      _
    // Predicated region
    $region142: #{tpu_custom_call.1} parent=1 // pred_check
      _
    $region143: #{tpu_custom_call.1} parent=1 // pred_check_branch
      %269 = sbr.rel (0) target = $region145
    $region144: #{tpu_custom_call.1} parent=1 // pred_region
      %270 = dma.done [#allocation21], 1024
    $region145: #{tpu_custom_call.1} parent=1 // pred_fallthru
      _
    // Predicated region
    $region146: #{tpu_custom_call.1} parent=1 // pred_check
      _
    $region147: #{tpu_custom_call.1} parent=1 // pred_check_branch
      %272 = sbr.rel (0) target = $region149
    $region148: #{tpu_custom_call.1} parent=1 // pred_region
      %273 = dma.done [#allocation24], 8192
    $region149: #{tpu_custom_call.1} parent=1 // pred_fallthru
      _
    // Predicated region
    $region150: #{tpu_custom_call.1} parent=1 // pred_check
      _
    $region151: #{tpu_custom_call.1} parent=1 // pred_check_branch
      %275 = sbr.rel (0) target = $region153
    $region152: #{tpu_custom_call.1} parent=1 // pred_region
      %276 = dma.done [#allocation24], 8192
    $region153: #{tpu_custom_call.1} parent=1 // pred_fallthru
      _
    // Predicated region
    $region154: #{tpu_custom_call.1} parent=1 // pred_check
      _
    $region155: #{tpu_custom_call.1} parent=1 // pred_check_branch
      %278 = sbr.rel (0) target = $region157
    $region156: #{tpu_custom_call.1} parent=1 // pred_region
      %279 = dma.done [#allocation27], 4096
    $region157: #{tpu_custom_call.1} parent=1 // pred_fallthru
      _
    %v280 = vld [vmem:[%s0] sm:$0xff]
    %v281 = vld [vmem:[%s2] sm:$0xf]
    %v282 = vld [vmem:[#allocation5] sm:$0x1]
    %v284 = vlaneseq
    %v285 = vshrl.u32 %v284, 7
    %v286 = vsub.s32 0, %v285
    %v287 = vrot.slane %v282, %v286
    %vm289 = vcmask 31744
    %v291 = vsel %vm289, %v280, 0
    %vm293 = vcmask 1043456
    %v295 = vsel %vm293, %v281, 0
    %297 = vmatprep.subr.mxu0 0.0
    %298 = vmatpush1.msra.mxu0 %v295
    %299 = vmatprep.subr.mxu0 0.0
    %300 = vmatpush1.msra.mxu0 0.0
    %301 = vmatprep.subr.mxu0 0.0
    %302 = vmatpush1.msra.mxu0 0.0
    %303 = vmatprep.subr.mxu0 0.0
    %304 = vmatpush1.msra.mxu0 0.0
    %305 = vmatprep.subr.mxu0 0.0
    %306 = vmatpush1.msra.mxu0 0.0
    %307 = vmatprep.subr.mxu0 0.0
    %308 = vmatpush1.msra.mxu0 0.0
    %309 = vmatprep.subr.mxu0 0.0
    %310 = vmatpush1.msra.mxu0 0.0
    %311 = vmatprep.subr.mxu0 0.0
    %312 = vmatpush1.msra.mxu0 0.0
    %313 = vmatprep.subr.mxu0 0.0
    %314 = vmatpush1.msra.mxu0 0.0
    %315 = vmatprep.subr.mxu0 0.0
    %316 = vmatpush1.msra.mxu0 0.0
    %317 = vmatprep.subr.mxu0 0.0
    %318 = vmatpush1.msra.mxu0 0.0
    %319 = vmatprep.subr.mxu0 0.0
    %320 = vmatpush1.msra.mxu0 0.0
    %321 = vmatprep.subr.mxu0 0.0
    %322 = vmatpush1.msra.mxu0 0.0
    %323 = vmatprep.subr.mxu0 0.0
    %324 = vmatpush1.msra.mxu0 0.0
    %325 = vmatprep.subr.mxu0 0.0
    %326 = vmatpush1.msra.mxu0 0.0
    %327 = vmatprep.subr.mxu0 0.0
    %328 = vmatpush1.msra.mxu0 0.0
    %329 = vmatprep.subr.mxu0 0.0
    %330 = vmatpush1.msra.mxu0 0.0
    %331 = vmatprep.subr.mxu0 0.0
    %332 = vmatpush1.msra.mxu0 0.0
    %333 = vmatprep.subr.mxu0 0.0
    %334 = vmatpush1.msra.mxu0 0.0
    %335 = vmatprep.subr.mxu0 0.0
    %336 = vmatpush1.msra.mxu0 0.0
    %337 = vmatprep.subr.mxu0 0.0
    %338 = vmatpush1.msra.mxu0 0.0
    %339 = vmatprep.subr.mxu0 0.0
    %340 = vmatpush1.msra.mxu0 0.0
    %341 = vmatprep.subr.mxu0 0.0
    %342 = vmatpush1.msra.mxu0 0.0
    %343 = vmatprep.subr.mxu0 0.0
    %344 = vmatpush1.msra.mxu0 0.0
    %345 = vmatprep.subr.mxu0 0.0
    %346 = vmatpush1.msra.mxu0 0.0
    %347 = vmatprep.subr.mxu0 0.0
    %348 = vmatpush1.msra.mxu0 0.0
    %349 = vmatprep.subr.mxu0 0.0
    %350 = vmatpush1.msra.mxu0 0.0
    %351 = vmatprep.subr.mxu0 0.0
    %352 = vmatpush1.msra.mxu0 0.0
    %353 = vmatprep.subr.mxu0 0.0
    %354 = vmatpush1.msra.mxu0 0.0
    %355 = vmatprep.subr.mxu0 0.0
    %356 = vmatpush1.msra.mxu0 0.0
    %357 = vmatprep.subr.mxu0 0.0
    %358 = vmatpush1.msra.mxu0 0.0
    %359 = vmatprep.subr.mxu0 0.0
    %360 = vmatpush1.msra.mxu0 0.0
    %361 = vmatprep.mubr.f32.mxu0 0.0
    %362 = vmatmul.mubr.f32.gmra.mrb[0].mxu0 %v291
    %v363 = vpop.f32.mrb[0].mxu0
    %v364 = vadd.f32 %v287, %v363
    %v365 = vpop.f32.mrb[0].mxu0
    %366 = vdwg.mxu0
    %v367 = vsub.f32 0.0, %v364
    %v368 = vmul.f32 %v367, 1.442695
    %v369 = vpow.pop %v368
    %v370 = vadd.f32 %v369, 1.0
    %v371 = vrcp.pop %v370
    %v372 = vmul.f32 1.0, %v371
    %v373 = vld [vmem:[#allocation2] sm:$0xff]
    %v374 = vld [vmem:[#allocation7] sm:$0xff]
    %vm375 = vcmask 64512
    %v377 = vsel %vm375, %v373, 0
    %379 = vmatprep.subr.mxu0 0.0
    %380 = vmatpush1.msra.mxu0 %v374
    %381 = vmatprep.subr.mxu0 0.0
    %382 = vmatpush1.msra.mxu0 0.0
    %383 = vmatprep.subr.mxu0 0.0
    %384 = vmatpush1.msra.mxu0 0.0
    %385 = vmatprep.subr.mxu0 0.0
    %386 = vmatpush1.msra.mxu0 0.0
    %387 = vmatprep.subr.mxu0 0.0
    %388 = vmatpush1.msra.mxu0 0.0
    %389 = vmatprep.subr.mxu0 0.0
    %390 = vmatpush1.msra.mxu0 0.0
    %391 = vmatprep.subr.mxu0 0.0
    %392 = vmatpush1.msra.mxu0 0.0
    %393 = vmatprep.subr.mxu0 0.0
    %394 = vmatpush1.msra.mxu0 0.0
    %395 = vmatprep.subr.mxu0 0.0
    %396 = vmatpush1.msra.mxu0 0.0
    %397 = vmatprep.subr.mxu0 0.0
    %398 = vmatpush1.msra.mxu0 0.0
    %399 = vmatprep.subr.mxu0 0.0
    %400 = vmatpush1.msra.mxu0 0.0
    %401 = vmatprep.subr.mxu0 0.0
    %402 = vmatpush1.msra.mxu0 0.0
    %403 = vmatprep.subr.mxu0 0.0
    %404 = vmatpush1.msra.mxu0 0.0
    %405 = vmatprep.subr.mxu0 0.0
    %406 = vmatpush1.msra.mxu0 0.0
    %407 = vmatprep.subr.mxu0 0.0
    %408 = vmatpush1.msra.mxu0 0.0
    %409 = vmatprep.subr.mxu0 0.0
    %410 = vmatpush1.msra.mxu0 0.0
    %411 = vmatprep.subr.mxu0 0.0
    %412 = vmatpush1.msra.mxu0 0.0
    %413 = vmatprep.subr.mxu0 0.0
    %414 = vmatpush1.msra.mxu0 0.0
    %415 = vmatprep.subr.mxu0 0.0
    %416 = vmatpush1.msra.mxu0 0.0
    %417 = vmatprep.subr.mxu0 0.0
    %418 = vmatpush1.msra.mxu0 0.0
    %419 = vmatprep.subr.mxu0 0.0
    %420 = vmatpush1.msra.mxu0 0.0
    %421 = vmatprep.subr.mxu0 0.0
    %422 = vmatpush1.msra.mxu0 0.0
    %423 = vmatprep.subr.mxu0 0.0
    %424 = vmatpush1.msra.mxu0 0.0
    %425 = vmatprep.subr.mxu0 0.0
    %426 = vmatpush1.msra.mxu0 0.0
    %427 = vmatprep.subr.mxu0 0.0
    %428 = vmatpush1.msra.mxu0 0.0
    %429 = vmatprep.subr.mxu0 0.0
    %430 = vmatpush1.msra.mxu0 0.0
    %431 = vmatprep.subr.mxu0 0.0
    %432 = vmatpush1.msra.mxu0 0.0
    %433 = vmatprep.subr.mxu0 0.0
    %434 = vmatpush1.msra.mxu0 0.0
    %435 = vmatprep.subr.mxu0 0.0
    %436 = vmatpush1.msra.mxu0 0.0
    %437 = vmatprep.subr.mxu0 0.0
    %438 = vmatpush1.msra.mxu0 0.0
    %439 = vmatprep.subr.mxu0 0.0
    %440 = vmatpush1.msra.mxu0 0.0
    %441 = vmatprep.subr.mxu0 0.0
    %442 = vmatpush1.msra.mxu0 0.0
    %443 = vmatprep.mubr.f32.mxu0 0.0
    %444 = vmatmul.mubr.f32.gmra.mrb[0].mxu0 %v377
    %v445 = vpop.f32.mrb[0].mxu0
    %v446 = vadd.f32 0.0, %v445
    %v447 = vpop.f32.mrb[0].mxu0
    %448 = vdwg.mxu0
    %v449 = vld [vmem:[#allocation8] sm:$0xff]
    %v450 = vld [vmem:[#allocation8 + $0x8] sm:$0xff]
    %v451 = vld [vmem:[#allocation8 + $0x10] sm:$0xff]
    %v452 = vld [vmem:[#allocation8 + $0x18] sm:$0xff]
    %vm453 = vcmask 261120
    %v455 = vsel %vm453, %v446, 0
    %457 = vmatprep.subr.mxu0 0.0
    %458 = vmatpush1.msra.mxu0 %v449
    %459 = vmatprep.subr.mxu0 0.0
    %460 = vmatpush1.msra.mxu0 %v450
    %461 = vmatprep.subr.mxu0 0.0
    %462 = vmatpush1.msra.mxu0 %v451
    %463 = vmatprep.subr.mxu0 0.0
    %464 = vmatpush1.msra.mxu0 %v452
    %465 = vmatprep.subr.mxu0 0.0
    %466 = vmatpush1.msra.mxu0 0.0
    %467 = vmatprep.subr.mxu0 0.0
    %468 = vmatpush1.msra.mxu0 0.0
    %469 = vmatprep.subr.mxu0 0.0
    %470 = vmatpush1.msra.mxu0 0.0
    %471 = vmatprep.subr.mxu0 0.0
    %472 = vmatpush1.msra.mxu0 0.0
    %473 = vmatprep.subr.mxu0 0.0
    %474 = vmatpush1.msra.mxu0 0.0
    %475 = vmatprep.subr.mxu0 0.0
    %476 = vmatpush1.msra.mxu0 0.0
    %477 = vmatprep.subr.mxu0 0.0
    %478 = vmatpush1.msra.mxu0 0.0
    %479 = vmatprep.subr.mxu0 0.0
    %480 = vmatpush1.msra.mxu0 0.0
    %481 = vmatprep.subr.mxu0 0.0
    %482 = vmatpush1.msra.mxu0 0.0
    %483 = vmatprep.subr.mxu0 0.0
    %484 = vmatpush1.msra.mxu0 0.0
    %485 = vmatprep.subr.mxu0 0.0
    %486 = vmatpush1.msra.mxu0 0.0
    %487 = vmatprep.subr.mxu0 0.0
    %488 = vmatpush1.msra.mxu0 0.0
    %489 = vmatprep.subr.mxu0 0.0
    %490 = vmatpush1.msra.mxu0 0.0
    %491 = vmatprep.subr.mxu0 0.0
    %492 = vmatpush1.msra.mxu0 0.0
    %493 = vmatprep.subr.mxu0 0.0
    %494 = vmatpush1.msra.mxu0 0.0
    %495 = vmatprep.subr.mxu0 0.0
    %496 = vmatpush1.msra.mxu0 0.0
    %497 = vmatprep.subr.mxu0 0.0
    %498 = vmatpush1.msra.mxu0 0.0
    %499 = vmatprep.subr.mxu0 0.0
    %500 = vmatpush1.msra.mxu0 0.0
    %501 = vmatprep.subr.mxu0 0.0
    %502 = vmatpush1.msra.mxu0 0.0
    %503 = vmatprep.subr.mxu0 0.0
    %504 = vmatpush1.msra.mxu0 0.0
    %505 = vmatprep.subr.mxu0 0.0
    %506 = vmatpush1.msra.mxu0 0.0
    %507 = vmatprep.subr.mxu0 0.0
    %508 = vmatpush1.msra.mxu0 0.0
    %509 = vmatprep.subr.mxu0 0.0
    %510 = vmatpush1.msra.mxu0 0.0
    %511 = vmatprep.subr.mxu0 0.0
    %512 = vmatpush1.msra.mxu0 0.0
    %513 = vmatprep.subr.mxu0 0.0
    %514 = vmatpush1.msra.mxu0 0.0
    %515 = vmatprep.subr.mxu0 0.0
    %516 = vmatpush1.msra.mxu0 0.0
    %517 = vmatprep.subr.mxu0 0.0
    %518 = vmatpush1.msra.mxu0 0.0
    %519 = vmatprep.subr.mxu0 0.0
    %520 = vmatpush1.msra.mxu0 0.0
    %521 = vmatprep.mubr.f32.mxu0 0.0
    %522 = vmatmul.mubr.f32.gmra.mrb[0].mxu0 %v455
    %v523 = vpop.f32.mrb[0].mxu0
    %v524 = vadd.f32 0.0, %v523
    %v525 = vpop.f32.mrb[0].mxu0
    %526 = vdwg.mxu0
    %v527 = vsub.f32 %v446, %v524
    %v528 = vmul.f32 %v527, %v527
    %v530 = vsel %vm453, %v528, 0
    %532 = vmatprep.subr.mxu0 0.0
    %533 = vmatpush1.msra.mxu0 %v449
    %534 = vmatprep.subr.mxu0 0.0
    %535 = vmatpush1.msra.mxu0 %v450
    %536 = vmatprep.subr.mxu0 0.0
    %537 = vmatpush1.msra.mxu0 %v451
    %538 = vmatprep.subr.mxu0 0.0
    %539 = vmatpush1.msra.mxu0 %v452
    %540 = vmatprep.subr.mxu0 0.0
    %541 = vmatpush1.msra.mxu0 0.0
    %542 = vmatprep.subr.mxu0 0.0
    %543 = vmatpush1.msra.mxu0 0.0
    %544 = vmatprep.subr.mxu0 0.0
    %545 = vmatpush1.msra.mxu0 0.0
    %546 = vmatprep.subr.mxu0 0.0
    %547 = vmatpush1.msra.mxu0 0.0
    %548 = vmatprep.subr.mxu0 0.0
    %549 = vmatpush1.msra.mxu0 0.0
    %550 = vmatprep.subr.mxu0 0.0
    %551 = vmatpush1.msra.mxu0 0.0
    %552 = vmatprep.subr.mxu0 0.0
    %553 = vmatpush1.msra.mxu0 0.0
    %554 = vmatprep.subr.mxu0 0.0
    %555 = vmatpush1.msra.mxu0 0.0
    %556 = vmatprep.subr.mxu0 0.0
    %557 = vmatpush1.msra.mxu0 0.0
    %558 = vmatprep.subr.mxu0 0.0
    %559 = vmatpush1.msra.mxu0 0.0
    %560 = vmatprep.subr.mxu0 0.0
    %561 = vmatpush1.msra.mxu0 0.0
    %562 = vmatprep.subr.mxu0 0.0
    %563 = vmatpush1.msra.mxu0 0.0
    %564 = vmatprep.subr.mxu0 0.0
    %565 = vmatpush1.msra.mxu0 0.0
    %566 = vmatprep.subr.mxu0 0.0
    %567 = vmatpush1.msra.mxu0 0.0
    %568 = vmatprep.subr.mxu0 0.0
    %569 = vmatpush1.msra.mxu0 0.0
    %570 = vmatprep.subr.mxu0 0.0
    %571 = vmatpush1.msra.mxu0 0.0
    %572 = vmatprep.subr.mxu0 0.0
    %573 = vmatpush1.msra.mxu0 0.0
    %574 = vmatprep.subr.mxu0 0.0
    %575 = vmatpush1.msra.mxu0 0.0
    %576 = vmatprep.subr.mxu0 0.0
    %577 = vmatpush1.msra.mxu0 0.0
    %578 = vmatprep.subr.mxu0 0.0
    %579 = vmatpush1.msra.mxu0 0.0
    %580 = vmatprep.subr.mxu0 0.0
    %581 = vmatpush1.msra.mxu0 0.0
    %582 = vmatprep.subr.mxu0 0.0
    %583 = vmatpush1.msra.mxu0 0.0
    %584 = vmatprep.subr.mxu0 0.0
    %585 = vmatpush1.msra.mxu0 0.0
    %586 = vmatprep.subr.mxu0 0.0
    %587 = vmatpush1.msra.mxu0 0.0
    %588 = vmatprep.subr.mxu0 0.0
    %589 = vmatpush1.msra.mxu0 0.0
    %590 = vmatprep.subr.mxu0 0.0
    %591 = vmatpush1.msra.mxu0 0.0
    %592 = vmatprep.subr.mxu0 0.0
    %593 = vmatpush1.msra.mxu0 0.0
    %594 = vmatprep.subr.mxu0 0.0
    %595 = vmatpush1.msra.mxu0 0.0
    %596 = vmatprep.mubr.f32.mxu0 0.0
    %597 = vmatmul.mubr.f32.gmra.mrb[0].mxu0 %v530
    %v598 = vpop.f32.mrb[0].mxu0
    %v599 = vadd.f32 1e-05, %v598
    %v600 = vpop.f32.mrb[0].mxu0
    %601 = vdwg.mxu0
    %v602 = vrsqrt.pop %v599
    %v603 = vmul.f32 %v527, %v602
    %v604 = vld [vmem:[#allocation10] sm:$0xff]
    %v605 = vld [vmem:[#allocation10 + $0x8] sm:$0xff]
    %v606 = vld [vmem:[#allocation10 + $0x10] sm:$0xff]
    %v607 = vld [vmem:[#allocation10 + $0x18] sm:$0xff]
    %v608 = vld [vmem:[#allocation11] sm:$0x1]
    %v610 = vlaneseq
    %v611 = vshrl.u32 %v610, 7
    %v612 = vsub.s32 0, %v611
    %v613 = vrot.slane %v608, %v612
    %v616 = vsel %vm453, %v603, 0
    %618 = vmatprep.subr.mxu0 0.0
    %619 = vmatpush1.msra.mxu0 %v604
    %620 = vmatprep.subr.mxu0 0.0
    %621 = vmatpush1.msra.mxu0 %v605
    %622 = vmatprep.subr.mxu0 0.0
    %623 = vmatpush1.msra.mxu0 %v606
    %624 = vmatprep.subr.mxu0 0.0
    %625 = vmatpush1.msra.mxu0 %v607
    %626 = vmatprep.subr.mxu0 0.0
    %627 = vmatpush1.msra.mxu0 0.0
    %628 = vmatprep.subr.mxu0 0.0
    %629 = vmatpush1.msra.mxu0 0.0
    %630 = vmatprep.subr.mxu0 0.0
    %631 = vmatpush1.msra.mxu0 0.0
    %632 = vmatprep.subr.mxu0 0.0
    %633 = vmatpush1.msra.mxu0 0.0
    %634 = vmatprep.subr.mxu0 0.0
    %635 = vmatpush1.msra.mxu0 0.0
    %636 = vmatprep.subr.mxu0 0.0
    %637 = vmatpush1.msra.mxu0 0.0
    %638 = vmatprep.subr.mxu0 0.0
    %639 = vmatpush1.msra.mxu0 0.0
    %640 = vmatprep.subr.mxu0 0.0
    %641 = vmatpush1.msra.mxu0 0.0
    %642 = vmatprep.subr.mxu0 0.0
    %643 = vmatpush1.msra.mxu0 0.0
    %644 = vmatprep.subr.mxu0 0.0
    %645 = vmatpush1.msra.mxu0 0.0
    %646 = vmatprep.subr.mxu0 0.0
    %647 = vmatpush1.msra.mxu0 0.0
    %648 = vmatprep.subr.mxu0 0.0
    %649 = vmatpush1.msra.mxu0 0.0
    %650 = vmatprep.subr.mxu0 0.0
    %651 = vmatpush1.msra.mxu0 0.0
    %652 = vmatprep.subr.mxu0 0.0
    %653 = vmatpush1.msra.mxu0 0.0
    %654 = vmatprep.subr.mxu0 0.0
    %655 = vmatpush1.msra.mxu0 0.0
    %656 = vmatprep.subr.mxu0 0.0
    %657 = vmatpush1.msra.mxu0 0.0
    %658 = vmatprep.subr.mxu0 0.0
    %659 = vmatpush1.msra.mxu0 0.0
    %660 = vmatprep.subr.mxu0 0.0
    %661 = vmatpush1.msra.mxu0 0.0
    %662 = vmatprep.subr.mxu0 0.0
    %663 = vmatpush1.msra.mxu0 0.0
    %664 = vmatprep.subr.mxu0 0.0
    %665 = vmatpush1.msra.mxu0 0.0
    %666 = vmatprep.subr.mxu0 0.0
    %667 = vmatpush1.msra.mxu0 0.0
    %668 = vmatprep.subr.mxu0 0.0
    %669 = vmatpush1.msra.mxu0 0.0
    %670 = vmatprep.subr.mxu0 0.0
    %671 = vmatpush1.msra.mxu0 0.0
    %672 = vmatprep.subr.mxu0 0.0
    %673 = vmatpush1.msra.mxu0 0.0
    %674 = vmatprep.subr.mxu0 0.0
    %675 = vmatpush1.msra.mxu0 0.0
    %676 = vmatprep.subr.mxu0 0.0
    %677 = vmatpush1.msra.mxu0 0.0
    %678 = vmatprep.subr.mxu0 0.0
    %679 = vmatpush1.msra.mxu0 0.0
    %680 = vmatprep.subr.mxu0 0.0
    %681 = vmatpush1.msra.mxu0 0.0
    %682 = vmatprep.mubr.f32.mxu0 0.0
    %683 = vmatmul.mubr.f32.gmra.mrb[0].mxu0 %v616
    %v684 = vpop.f32.mrb[0].mxu0
    %v685 = vadd.f32 %v613, %v684
    %v686 = vpop.f32.mrb[0].mxu0
    %687 = vdwg.mxu0
    %v688 = vsub.f32 0.0, %v685
    %v689 = vmul.f32 %v688, 1.442695
    %v690 = vpow.pop %v689
    %v691 = vadd.f32 %v690, 1.0
    %v692 = vrcp.pop %v691
    %v693 = vmul.f32 1.0, %v692
    %v694 = vld [vmem:[%s8] sm:$0xff]
    %v695 = vld [vmem:[%s8 + $0x8] sm:$0xff]
    %v696 = vld [vmem:[%s8 + $0x10] sm:$0xff]
    %v697 = vld [vmem:[%s8 + $0x18] sm:$0xff]
    %v698 = vld [vmem:[%s8 + $0x20] sm:$0xff]
    %v699 = vld [vmem:[%s8 + $0x28] sm:$0xff]
    %v700 = vld [vmem:[%s8 + $0x30] sm:$0xff]
    %v701 = vld [vmem:[%s8 + $0x38] sm:$0xff]
    %v702 = vld [vmem:[#allocation13] sm:$0xff]
    %v703 = vld [vmem:[#allocation13 + $0x8] sm:$0xff]
    %v704 = vld [vmem:[#allocation13 + $0x10] sm:$0xff]
    %v705 = vld [vmem:[#allocation13 + $0x18] sm:$0xff]
    %v707 = vsel %vm453, %v693, 0
    %709 = vmatprep.subr.mxu0 0.0
    %710 = vmatpush1.msra.mxu0 %v702
    %711 = vmatprep.subr.mxu0 0.0
    %712 = vmatpush1.msra.mxu0 %v703
    %713 = vmatprep.subr.mxu0 0.0
    %714 = vmatpush1.msra.mxu0 %v704
    %715 = vmatprep.subr.mxu0 0.0
    %716 = vmatpush1.msra.mxu0 %v705
    %717 = vmatprep.subr.mxu0 0.0
    %718 = vmatpush1.msra.mxu0 0.0
    %719 = vmatprep.subr.mxu0 0.0
    %720 = vmatpush1.msra.mxu0 0.0
    %721 = vmatprep.subr.mxu0 0.0
    %722 = vmatpush1.msra.mxu0 0.0
    %723 = vmatprep.subr.mxu0 0.0
    %724 = vmatpush1.msra.mxu0 0.0
    %725 = vmatprep.subr.mxu0 0.0
    %726 = vmatpush1.msra.mxu0 0.0
    %727 = vmatprep.subr.mxu0 0.0
    %728 = vmatpush1.msra.mxu0 0.0
    %729 = vmatprep.subr.mxu0 0.0
    %730 = vmatpush1.msra.mxu0 0.0
    %731 = vmatprep.subr.mxu0 0.0
    %732 = vmatpush1.msra.mxu0 0.0
    %733 = vmatprep.subr.mxu0 0.0
    %734 = vmatpush1.msra.mxu0 0.0
    %735 = vmatprep.subr.mxu0 0.0
    %736 = vmatpush1.msra.mxu0 0.0
    %737 = vmatprep.subr.mxu0 0.0
    %738 = vmatpush1.msra.mxu0 0.0
    %739 = vmatprep.subr.mxu0 0.0
    %740 = vmatpush1.msra.mxu0 0.0
    %741 = vmatprep.subr.mxu0 0.0
    %742 = vmatpush1.msra.mxu0 0.0
    %743 = vmatprep.subr.mxu0 0.0
    %744 = vmatpush1.msra.mxu0 0.0
    %745 = vmatprep.subr.mxu0 0.0
    %746 = vmatpush1.msra.mxu0 0.0
    %747 = vmatprep.subr.mxu0 0.0
    %748 = vmatpush1.msra.mxu0 0.0
    %749 = vmatprep.subr.mxu0 0.0
    %750 = vmatpush1.msra.mxu0 0.0
    %751 = vmatprep.subr.mxu0 0.0
    %752 = vmatpush1.msra.mxu0 0.0
    %753 = vmatprep.subr.mxu0 0.0
    %754 = vmatpush1.msra.mxu0 0.0
    %755 = vmatprep.subr.mxu0 0.0
    %756 = vmatpush1.msra.mxu0 0.0
    %757 = vmatprep.subr.mxu0 0.0
    %758 = vmatpush1.msra.mxu0 0.0
    %759 = vmatprep.subr.mxu0 0.0
    %760 = vmatpush1.msra.mxu0 0.0
    %761 = vmatprep.subr.mxu0 0.0
    %762 = vmatpush1.msra.mxu0 0.0
    %763 = vmatprep.subr.mxu0 0.0
    %764 = vmatpush1.msra.mxu0 0.0
    %765 = vmatprep.subr.mxu0 0.0
    %766 = vmatpush1.msra.mxu0 0.0
    %767 = vmatprep.subr.mxu0 0.0
    %768 = vmatpush1.msra.mxu0 0.0
    %769 = vmatprep.subr.mxu0 0.0
    %770 = vmatpush1.msra.mxu0 0.0
    %771 = vmatprep.subr.mxu0 0.0
    %772 = vmatpush1.msra.mxu0 0.0
    %773 = vmatprep.mubr.f32.mxu0 0.0
    %774 = vmatmul.mubr.f32.gmra.mrb[0].mxu0 %v707
    %v775 = vpop.f32.mrb[0].mxu0
    %v776 = vadd.f32 0.0, %v775
    %v777 = vpop.f32.mrb[0].mxu0
    %778 = vdwg.mxu0
    %vm779 = vcmask 523264
    %v781 = vsel %vm779, %v372, 0
    %783 = vmatprep.subr.mxu0 0.0
    %784 = vmatpush1.msra.mxu0 %v694
    %785 = vmatprep.subr.mxu0 0.0
    %786 = vmatpush1.msra.mxu0 %v695
    %787 = vmatprep.subr.mxu0 0.0
    %788 = vmatpush1.msra.mxu0 %v696
    %789 = vmatprep.subr.mxu0 0.0
    %790 = vmatpush1.msra.mxu0 %v697
    %791 = vmatprep.subr.mxu0 0.0
    %792 = vmatpush1.msra.mxu0 %v698
    %793 = vmatprep.subr.mxu0 0.0
    %794 = vmatpush1.msra.mxu0 %v699
    %795 = vmatprep.subr.mxu0 0.0
    %796 = vmatpush1.msra.mxu0 %v700
    %797 = vmatprep.subr.mxu0 0.0
    %798 = vmatpush1.msra.mxu0 %v701
    %799 = vmatprep.subr.mxu0 0.0
    %800 = vmatpush1.msra.mxu0 0.0
    %801 = vmatprep.subr.mxu0 0.0
    %802 = vmatpush1.msra.mxu0 0.0
    %803 = vmatprep.subr.mxu0 0.0
    %804 = vmatpush1.msra.mxu0 0.0
    %805 = vmatprep.subr.mxu0 0.0
    %806 = vmatpush1.msra.mxu0 0.0
    %807 = vmatprep.subr.mxu0 0.0
    %808 = vmatpush1.msra.mxu0 0.0
    %809 = vmatprep.subr.mxu0 0.0
    %810 = vmatpush1.msra.mxu0 0.0
    %811 = vmatprep.subr.mxu0 0.0
    %812 = vmatpush1.msra.mxu0 0.0
    %813 = vmatprep.subr.mxu0 0.0
    %814 = vmatpush1.msra.mxu0 0.0
    %815 = vmatprep.subr.mxu0 0.0
    %816 = vmatpush1.msra.mxu0 0.0
    %817 = vmatprep.subr.mxu0 0.0
    %818 = vmatpush1.msra.mxu0 0.0
    %819 = vmatprep.subr.mxu0 0.0
    %820 = vmatpush1.msra.mxu0 0.0
    %821 = vmatprep.subr.mxu0 0.0
    %822 = vmatpush1.msra.mxu0 0.0
    %823 = vmatprep.subr.mxu0 0.0
    %824 = vmatpush1.msra.mxu0 0.0
    %825 = vmatprep.subr.mxu0 0.0
    %826 = vmatpush1.msra.mxu0 0.0
    %827 = vmatprep.subr.mxu0 0.0
    %828 = vmatpush1.msra.mxu0 0.0
    %829 = vmatprep.subr.mxu0 0.0
    %830 = vmatpush1.msra.mxu0 0.0
    %831 = vmatprep.subr.mxu0 0.0
    %832 = vmatpush1.msra.mxu0 0.0
    %833 = vmatprep.subr.mxu0 0.0
    %834 = vmatpush1.msra.mxu0 0.0
    %835 = vmatprep.subr.mxu0 0.0
    %836 = vmatpush1.msra.mxu0 0.0
    %837 = vmatprep.subr.mxu0 0.0
    %838 = vmatpush1.msra.mxu0 0.0
    %839 = vmatprep.subr.mxu0 0.0
    %840 = vmatpush1.msra.mxu0 0.0
    %841 = vmatprep.subr.mxu0 0.0
    %842 = vmatpush1.msra.mxu0 0.0
    %843 = vmatprep.subr.mxu0 0.0
    %844 = vmatpush1.msra.mxu0 0.0
    %845 = vmatprep.subr.mxu0 0.0
    %846 = vmatpush1.msra.mxu0 0.0
    %847 = vmatprep.mubr.f32.mxu0 0.0
    %848 = vmatmul.mubr.f32.gmra.mrb[0].mxu0 %v781
    %v849 = vpop.f32.mrb[0].mxu0
    %v850 = vadd.f32 %v776, %v849
    %v851 = vpop.f32.mrb[0].mxu0
    %852 = vdwg.mxu0
    %v853 = vld [vmem:[#allocation14] sm:$0xff]
    %v854 = vld [vmem:[#allocation14 + $0x8] sm:$0xff]
    %v855 = vld [vmem:[#allocation14 + $0x10] sm:$0xff]
    %v856 = vld [vmem:[#allocation14 + $0x18] sm:$0xff]
    %v857 = vld [vmem:[#allocation14 + $0x20] sm:$0xff]
    %v858 = vld [vmem:[#allocation14 + $0x28] sm:$0xff]
    %v859 = vld [vmem:[#allocation14 + $0x30] sm:$0xff]
    %v860 = vld [vmem:[#allocation14 + $0x38] sm:$0xff]
    %v861 = vld [vmem:[#allocation14 + $0x40] sm:$0xff]
    %v862 = vld [vmem:[#allocation14 + $0x48] sm:$0xff]
    %v863 = vld [vmem:[#allocation14 + $0x50] sm:$0xff]
    %v864 = vld [vmem:[#allocation14 + $0x58] sm:$0xff]
    %vm865 = vcmask 785408
    %v867 = vsel %vm865, %v850, 0
    %869 = vmatprep.subr.mxu0 0.0
    %870 = vmatpush1.msra.mxu0 %v853
    %871 = vmatprep.subr.mxu0 0.0
    %872 = vmatpush1.msra.mxu0 %v854
    %873 = vmatprep.subr.mxu0 0.0
    %874 = vmatpush1.msra.mxu0 %v855
    %875 = vmatprep.subr.mxu0 0.0
    %876 = vmatpush1.msra.mxu0 %v856
    %877 = vmatprep.subr.mxu0 0.0
    %878 = vmatpush1.msra.mxu0 %v857
    %879 = vmatprep.subr.mxu0 0.0
    %880 = vmatpush1.msra.mxu0 %v858
    %881 = vmatprep.subr.mxu0 0.0
    %882 = vmatpush1.msra.mxu0 %v859
    %883 = vmatprep.subr.mxu0 0.0
    %884 = vmatpush1.msra.mxu0 %v860
    %885 = vmatprep.subr.mxu0 0.0
    %886 = vmatpush1.msra.mxu0 %v861
    %887 = vmatprep.subr.mxu0 0.0
    %888 = vmatpush1.msra.mxu0 %v862
    %889 = vmatprep.subr.mxu0 0.0
    %890 = vmatpush1.msra.mxu0 %v863
    %891 = vmatprep.subr.mxu0 0.0
    %892 = vmatpush1.msra.mxu0 %v864
    %893 = vmatprep.subr.mxu0 0.0
    %894 = vmatpush1.msra.mxu0 0.0
    %895 = vmatprep.subr.mxu0 0.0
    %896 = vmatpush1.msra.mxu0 0.0
    %897 = vmatprep.subr.mxu0 0.0
    %898 = vmatpush1.msra.mxu0 0.0
    %899 = vmatprep.subr.mxu0 0.0
    %900 = vmatpush1.msra.mxu0 0.0
    %901 = vmatprep.subr.mxu0 0.0
    %902 = vmatpush1.msra.mxu0 0.0
    %903 = vmatprep.subr.mxu0 0.0
    %904 = vmatpush1.msra.mxu0 0.0
    %905 = vmatprep.subr.mxu0 0.0
    %906 = vmatpush1.msra.mxu0 0.0
    %907 = vmatprep.subr.mxu0 0.0
    %908 = vmatpush1.msra.mxu0 0.0
    %909 = vmatprep.subr.mxu0 0.0
    %910 = vmatpush1.msra.mxu0 0.0
    %911 = vmatprep.subr.mxu0 0.0
    %912 = vmatpush1.msra.mxu0 0.0
    %913 = vmatprep.subr.mxu0 0.0
    %914 = vmatpush1.msra.mxu0 0.0
    %915 = vmatprep.subr.mxu0 0.0
    %916 = vmatpush1.msra.mxu0 0.0
    %917 = vmatprep.subr.mxu0 0.0
    %918 = vmatpush1.msra.mxu0 0.0
    %919 = vmatprep.subr.mxu0 0.0
    %920 = vmatpush1.msra.mxu0 0.0
    %921 = vmatprep.subr.mxu0 0.0
    %922 = vmatpush1.msra.mxu0 0.0
    %923 = vmatprep.subr.mxu0 0.0
    %924 = vmatpush1.msra.mxu0 0.0
    %925 = vmatprep.subr.mxu0 0.0
    %926 = vmatpush1.msra.mxu0 0.0
    %927 = vmatprep.subr.mxu0 0.0
    %928 = vmatpush1.msra.mxu0 0.0
    %929 = vmatprep.subr.mxu0 0.0
    %930 = vmatpush1.msra.mxu0 0.0
    %931 = vmatprep.subr.mxu0 0.0
    %932 = vmatpush1.msra.mxu0 0.0
    %933 = vmatprep.mubr.f32.mxu0 0.0
    %934 = vmatmul.mubr.f32.gmra.mrb[0].mxu0 %v867
    %v935 = vpop.f32.mrb[0].mxu0
    %v936 = vadd.f32 0.0, %v935
    %v937 = vpop.f32.mrb[0].mxu0
    %938 = vdwg.mxu0
    %v939 = vsub.f32 %v850, %v936
    %v940 = vmul.f32 %v939, %v939
    %v942 = vsel %vm865, %v940, 0
    %944 = vmatprep.subr.mxu0 0.0
    %945 = vmatpush1.msra.mxu0 %v853
    %946 = vmatprep.subr.mxu0 0.0
    %947 = vmatpush1.msra.mxu0 %v854
    %948 = vmatprep.subr.mxu0 0.0
    %949 = vmatpush1.msra.mxu0 %v855
    %950 = vmatprep.subr.mxu0 0.0
    %951 = vmatpush1.msra.mxu0 %v856
    %952 = vmatprep.subr.mxu0 0.0
    %953 = vmatpush1.msra.mxu0 %v857
    %954 = vmatprep.subr.mxu0 0.0
    %955 = vmatpush1.msra.mxu0 %v858
    %956 = vmatprep.subr.mxu0 0.0
    %957 = vmatpush1.msra.mxu0 %v859
    %958 = vmatprep.subr.mxu0 0.0
    %959 = vmatpush1.msra.mxu0 %v860
    %960 = vmatprep.subr.mxu0 0.0
    %961 = vmatpush1.msra.mxu0 %v861
    %962 = vmatprep.subr.mxu0 0.0
    %963 = vmatpush1.msra.mxu0 %v862
    %964 = vmatprep.subr.mxu0 0.0
    %965 = vmatpush1.msra.mxu0 %v863
    %966 = vmatprep.subr.mxu0 0.0
    %967 = vmatpush1.msra.mxu0 %v864
    %968 = vmatprep.subr.mxu0 0.0
    %969 = vmatpush1.msra.mxu0 0.0
    %970 = vmatprep.subr.mxu0 0.0
    %971 = vmatpush1.msra.mxu0 0.0
    %972 = vmatprep.subr.mxu0 0.0
    %973 = vmatpush1.msra.mxu0 0.0
    %974 = vmatprep.subr.mxu0 0.0
    %975 = vmatpush1.msra.mxu0 0.0
    %976 = vmatprep.subr.mxu0 0.0
    %977 = vmatpush1.msra.mxu0 0.0
    %978 = vmatprep.subr.mxu0 0.0
    %979 = vmatpush1.msra.mxu0 0.0
    %980 = vmatprep.subr.mxu0 0.0
    %981 = vmatpush1.msra.mxu0 0.0
    %982 = vmatprep.subr.mxu0 0.0
    %983 = vmatpush1.msra.mxu0 0.0
    %984 = vmatprep.subr.mxu0 0.0
    %985 = vmatpush1.msra.mxu0 0.0
    %986 = vmatprep.subr.mxu0 0.0
    %987 = vmatpush1.msra.mxu0 0.0
    %988 = vmatprep.subr.mxu0 0.0
    %989 = vmatpush1.msra.mxu0 0.0
    %990 = vmatprep.subr.mxu0 0.0
    %991 = vmatpush1.msra.mxu0 0.0
    %992 = vmatprep.subr.mxu0 0.0
    %993 = vmatpush1.msra.mxu0 0.0
    %994 = vmatprep.subr.mxu0 0.0
    %995 = vmatpush1.msra.mxu0 0.0
    %996 = vmatprep.subr.mxu0 0.0
    %997 = vmatpush1.msra.mxu0 0.0
    %998 = vmatprep.subr.mxu0 0.0
    %999 = vmatpush1.msra.mxu0 0.0
    %1000 = vmatprep.subr.mxu0 0.0
    %1001 = vmatpush1.msra.mxu0 0.0
    %1002 = vmatprep.subr.mxu0 0.0
    %1003 = vmatpush1.msra.mxu0 0.0
    %1004 = vmatprep.subr.mxu0 0.0
    %1005 = vmatpush1.msra.mxu0 0.0
    %1006 = vmatprep.subr.mxu0 0.0
    %1007 = vmatpush1.msra.mxu0 0.0
    %1008 = vmatprep.mubr.f32.mxu0 0.0
    %1009 = vmatmul.mubr.f32.gmra.mrb[0].mxu0 %v942
    %v1010 = vpop.f32.mrb[0].mxu0
    %v1011 = vadd.f32 1e-05, %v1010
    %v1012 = vpop.f32.mrb[0].mxu0
    %1013 = vdwg.mxu0
    %v1014 = vrsqrt.pop %v1011
    %v1015 = vmul.f32 %v939, %v1014
    %v1016 = vld [vmem:[#allocation16] sm:$0xff]
    %v1017 = vld [vmem:[#allocation16 + $0x8] sm:$0xff]
    %v1018 = vld [vmem:[#allocation16 + $0x10] sm:$0xff]
    %v1019 = vld [vmem:[#allocation16 + $0x18] sm:$0xff]
    %v1020 = vld [vmem:[#allocation16 + $0x20] sm:$0xff]
    %v1021 = vld [vmem:[#allocation16 + $0x28] sm:$0xff]
    %v1022 = vld [vmem:[#allocation16 + $0x30] sm:$0xff]
    %v1023 = vld [vmem:[#allocation16 + $0x38] sm:$0xff]
    %v1024 = vld [vmem:[#allocation16 + $0x40] sm:$0xff]
    %v1025 = vld [vmem:[#allocation16 + $0x48] sm:$0xff]
    %v1026 = vld [vmem:[#allocation16 + $0x50] sm:$0xff]
    %v1027 = vld [vmem:[#allocation16 + $0x58] sm:$0xff]
    %v1028 = vld [vmem:[#allocation17] sm:$0x1]
    %v1030 = vlaneseq
    %v1031 = vshrl.u32 %v1030, 7
    %v1032 = vsub.s32 0, %v1031
    %v1033 = vrot.slane %v1028, %v1032
    %v1036 = vsel %vm865, %v1015, 0
    %1038 = vmatprep.subr.mxu0 0.0
    %1039 = vmatpush1.msra.mxu0 %v1016
    %1040 = vmatprep.subr.mxu0 0.0
    %1041 = vmatpush1.msra.mxu0 %v1017
    %1042 = vmatprep.subr.mxu0 0.0
    %1043 = vmatpush1.msra.mxu0 %v1018
    %1044 = vmatprep.subr.mxu0 0.0
    %1045 = vmatpush1.msra.mxu0 %v1019
    %1046 = vmatprep.subr.mxu0 0.0
    %1047 = vmatpush1.msra.mxu0 %v1020
    %1048 = vmatprep.subr.mxu0 0.0
    %1049 = vmatpush1.msra.mxu0 %v1021
    %1050 = vmatprep.subr.mxu0 0.0
    %1051 = vmatpush1.msra.mxu0 %v1022
    %1052 = vmatprep.subr.mxu0 0.0
    %1053 = vmatpush1.msra.mxu0 %v1023
    %1054 = vmatprep.subr.mxu0 0.0
    %1055 = vmatpush1.msra.mxu0 %v1024
    %1056 = vmatprep.subr.mxu0 0.0
    %1057 = vmatpush1.msra.mxu0 %v1025
    %1058 = vmatprep.subr.mxu0 0.0
    %1059 = vmatpush1.msra.mxu0 %v1026
    %1060 = vmatprep.subr.mxu0 0.0
    %1061 = vmatpush1.msra.mxu0 %v1027
    %1062 = vmatprep.subr.mxu0 0.0
    %1063 = vmatpush1.msra.mxu0 0.0
    %1064 = vmatprep.subr.mxu0 0.0
    %1065 = vmatpush1.msra.mxu0 0.0
    %1066 = vmatprep.subr.mxu0 0.0
    %1067 = vmatpush1.msra.mxu0 0.0
    %1068 = vmatprep.subr.mxu0 0.0
    %1069 = vmatpush1.msra.mxu0 0.0
    %1070 = vmatprep.subr.mxu0 0.0
    %1071 = vmatpush1.msra.mxu0 0.0
    %1072 = vmatprep.subr.mxu0 0.0
    %1073 = vmatpush1.msra.mxu0 0.0
    %1074 = vmatprep.subr.mxu0 0.0
    %1075 = vmatpush1.msra.mxu0 0.0
    %1076 = vmatprep.subr.mxu0 0.0
    %1077 = vmatpush1.msra.mxu0 0.0
    %1078 = vmatprep.subr.mxu0 0.0
    %1079 = vmatpush1.msra.mxu0 0.0
    %1080 = vmatprep.subr.mxu0 0.0
    %1081 = vmatpush1.msra.mxu0 0.0
    %1082 = vmatprep.subr.mxu0 0.0
    %1083 = vmatpush1.msra.mxu0 0.0
    %1084 = vmatprep.subr.mxu0 0.0
    %1085 = vmatpush1.msra.mxu0 0.0
    %1086 = vmatprep.subr.mxu0 0.0
    %1087 = vmatpush1.msra.mxu0 0.0
    %1088 = vmatprep.subr.mxu0 0.0
    %1089 = vmatpush1.msra.mxu0 0.0
    %1090 = vmatprep.subr.mxu0 0.0
    %1091 = vmatpush1.msra.mxu0 0.0
    %1092 = vmatprep.subr.mxu0 0.0
    %1093 = vmatpush1.msra.mxu0 0.0
    %1094 = vmatprep.subr.mxu0 0.0
    %1095 = vmatpush1.msra.mxu0 0.0
    %1096 = vmatprep.subr.mxu0 0.0
    %1097 = vmatpush1.msra.mxu0 0.0
    %1098 = vmatprep.subr.mxu0 0.0
    %1099 = vmatpush1.msra.mxu0 0.0
    %1100 = vmatprep.subr.mxu0 0.0
    %1101 = vmatpush1.msra.mxu0 0.0
    %1102 = vmatprep.mubr.f32.mxu0 0.0
    %1103 = vmatmul.mubr.f32.gmra.mrb[0].mxu0 %v1036
    %v1104 = vpop.f32.mrb[0].mxu0
    %v1105 = vadd.f32 %v1033, %v1104
    %v1106 = vpop.f32.mrb[0].mxu0
    %1107 = vdwg.mxu0
    %v1108 = vmax.f32 %v1105, 0.0
    %v1110 = vsel %vm865, %v1108, 0
    %1112 = vmatprep.subr.mxu0 0.0
    %1113 = vmatpush1.msra.mxu0 %v853
    %1114 = vmatprep.subr.mxu0 0.0
    %1115 = vmatpush1.msra.mxu0 %v854
    %1116 = vmatprep.subr.mxu0 0.0
    %1117 = vmatpush1.msra.mxu0 %v855
    %1118 = vmatprep.subr.mxu0 0.0
    %1119 = vmatpush1.msra.mxu0 %v856
    %1120 = vmatprep.subr.mxu0 0.0
    %1121 = vmatpush1.msra.mxu0 %v857
    %1122 = vmatprep.subr.mxu0 0.0
    %1123 = vmatpush1.msra.mxu0 %v858
    %1124 = vmatprep.subr.mxu0 0.0
    %1125 = vmatpush1.msra.mxu0 %v859
    %1126 = vmatprep.subr.mxu0 0.0
    %1127 = vmatpush1.msra.mxu0 %v860
    %1128 = vmatprep.subr.mxu0 0.0
    %1129 = vmatpush1.msra.mxu0 %v861
    %1130 = vmatprep.subr.mxu0 0.0
    %1131 = vmatpush1.msra.mxu0 %v862
    %1132 = vmatprep.subr.mxu0 0.0
    %1133 = vmatpush1.msra.mxu0 %v863
    %1134 = vmatprep.subr.mxu0 0.0
    %1135 = vmatpush1.msra.mxu0 %v864
    %1136 = vmatprep.subr.mxu0 0.0
    %1137 = vmatpush1.msra.mxu0 0.0
    %1138 = vmatprep.subr.mxu0 0.0
    %1139 = vmatpush1.msra.mxu0 0.0
    %1140 = vmatprep.subr.mxu0 0.0
    %1141 = vmatpush1.msra.mxu0 0.0
    %1142 = vmatprep.subr.mxu0 0.0
    %1143 = vmatpush1.msra.mxu0 0.0
    %1144 = vmatprep.subr.mxu0 0.0
    %1145 = vmatpush1.msra.mxu0 0.0
    %1146 = vmatprep.subr.mxu0 0.0
    %1147 = vmatpush1.msra.mxu0 0.0
    %1148 = vmatprep.subr.mxu0 0.0
    %1149 = vmatpush1.msra.mxu0 0.0
    %1150 = vmatprep.subr.mxu0 0.0
    %1151 = vmatpush1.msra.mxu0 0.0
    %1152 = vmatprep.subr.mxu0 0.0
    %1153 = vmatpush1.msra.mxu0 0.0
    %1154 = vmatprep.subr.mxu0 0.0
    %1155 = vmatpush1.msra.mxu0 0.0
    %1156 = vmatprep.subr.mxu0 0.0
    %1157 = vmatpush1.msra.mxu0 0.0
    %1158 = vmatprep.subr.mxu0 0.0
    %1159 = vmatpush1.msra.mxu0 0.0
    %1160 = vmatprep.subr.mxu0 0.0
    %1161 = vmatpush1.msra.mxu0 0.0
    %1162 = vmatprep.subr.mxu0 0.0
    %1163 = vmatpush1.msra.mxu0 0.0
    %1164 = vmatprep.subr.mxu0 0.0
    %1165 = vmatpush1.msra.mxu0 0.0
    %1166 = vmatprep.subr.mxu0 0.0
    %1167 = vmatpush1.msra.mxu0 0.0
    %1168 = vmatprep.subr.mxu0 0.0
    %1169 = vmatpush1.msra.mxu0 0.0
    %1170 = vmatprep.subr.mxu0 0.0
    %1171 = vmatpush1.msra.mxu0 0.0
    %1172 = vmatprep.subr.mxu0 0.0
    %1173 = vmatpush1.msra.mxu0 0.0
    %1174 = vmatprep.subr.mxu0 0.0
    %1175 = vmatpush1.msra.mxu0 0.0
    %1176 = vmatprep.mubr.f32.mxu0 0.0
    %1177 = vmatmul.mubr.f32.gmra.mrb[0].mxu0 %v1110
    %v1178 = vpop.f32.mrb[0].mxu0
    %v1179 = vadd.f32 0.0, %v1178
    %v1180 = vpop.f32.mrb[0].mxu0
    %1181 = vdwg.mxu0
    %v1182 = vsub.f32 %v1108, %v1179
    %v1183 = vmul.f32 %v1182, %v1182
    %v1185 = vsel %vm865, %v1183, 0
    %1187 = vmatprep.subr.mxu0 0.0
    %1188 = vmatpush1.msra.mxu0 %v853
    %1189 = vmatprep.subr.mxu0 0.0
    %1190 = vmatpush1.msra.mxu0 %v854
    %1191 = vmatprep.subr.mxu0 0.0
    %1192 = vmatpush1.msra.mxu0 %v855
    %1193 = vmatprep.subr.mxu0 0.0
    %1194 = vmatpush1.msra.mxu0 %v856
    %1195 = vmatprep.subr.mxu0 0.0
    %1196 = vmatpush1.msra.mxu0 %v857
    %1197 = vmatprep.subr.mxu0 0.0
    %1198 = vmatpush1.msra.mxu0 %v858
    %1199 = vmatprep.subr.mxu0 0.0
    %1200 = vmatpush1.msra.mxu0 %v859
    %1201 = vmatprep.subr.mxu0 0.0
    %1202 = vmatpush1.msra.mxu0 %v860
    %1203 = vmatprep.subr.mxu0 0.0
    %1204 = vmatpush1.msra.mxu0 %v861
    %1205 = vmatprep.subr.mxu0 0.0
    %1206 = vmatpush1.msra.mxu0 %v862
    %1207 = vmatprep.subr.mxu0 0.0
    %1208 = vmatpush1.msra.mxu0 %v863
    %1209 = vmatprep.subr.mxu0 0.0
    %1210 = vmatpush1.msra.mxu0 %v864
    %1211 = vmatprep.subr.mxu0 0.0
    %1212 = vmatpush1.msra.mxu0 0.0
    %1213 = vmatprep.subr.mxu0 0.0
    %1214 = vmatpush1.msra.mxu0 0.0
    %1215 = vmatprep.subr.mxu0 0.0
    %1216 = vmatpush1.msra.mxu0 0.0
    %1217 = vmatprep.subr.mxu0 0.0
    %1218 = vmatpush1.msra.mxu0 0.0
    %1219 = vmatprep.subr.mxu0 0.0
    %1220 = vmatpush1.msra.mxu0 0.0
    %1221 = vmatprep.subr.mxu0 0.0
    %1222 = vmatpush1.msra.mxu0 0.0
    %1223 = vmatprep.subr.mxu0 0.0
    %1224 = vmatpush1.msra.mxu0 0.0
    %1225 = vmatprep.subr.mxu0 0.0
    %1226 = vmatpush1.msra.mxu0 0.0
    %1227 = vmatprep.subr.mxu0 0.0
    %1228 = vmatpush1.msra.mxu0 0.0
    %1229 = vmatprep.subr.mxu0 0.0
    %1230 = vmatpush1.msra.mxu0 0.0
    %1231 = vmatprep.subr.mxu0 0.0
    %1232 = vmatpush1.msra.mxu0 0.0
    %1233 = vmatprep.subr.mxu0 0.0
    %1234 = vmatpush1.msra.mxu0 0.0
    %1235 = vmatprep.subr.mxu0 0.0
    %1236 = vmatpush1.msra.mxu0 0.0
    %1237 = vmatprep.subr.mxu0 0.0
    %1238 = vmatpush1.msra.mxu0 0.0
    %1239 = vmatprep.subr.mxu0 0.0
    %1240 = vmatpush1.msra.mxu0 0.0
    %1241 = vmatprep.subr.mxu0 0.0
    %1242 = vmatpush1.msra.mxu0 0.0
    %1243 = vmatprep.subr.mxu0 0.0
    %1244 = vmatpush1.msra.mxu0 0.0
    %1245 = vmatprep.subr.mxu0 0.0
    %1246 = vmatpush1.msra.mxu0 0.0
    %1247 = vmatprep.subr.mxu0 0.0
    %1248 = vmatpush1.msra.mxu0 0.0
    %1249 = vmatprep.subr.mxu0 0.0
    %1250 = vmatpush1.msra.mxu0 0.0
    %1251 = vmatprep.mubr.f32.mxu0 0.0
    %1252 = vmatmul.mubr.f32.gmra.mrb[0].mxu0 %v1185
    %v1253 = vpop.f32.mrb[0].mxu0
    %v1254 = vadd.f32 1e-05, %v1253
    %v1255 = vpop.f32.mrb[0].mxu0
    %1256 = vdwg.mxu0
    %v1257 = vrsqrt.pop %v1254
    %v1258 = vmul.f32 %v1182, %v1257
    %v1259 = vld [vmem:[%s13] sm:$0xff]
    %v1260 = vld [vmem:[%s13 + $0x8] sm:$0xff]
    %v1261 = vld [vmem:[%s13 + $0x10] sm:$0xff]
    %v1262 = vld [vmem:[%s13 + $0x18] sm:$0xff]
    %v1263 = vld [vmem:[%s13 + $0x20] sm:$0xff]
    %v1264 = vld [vmem:[%s13 + $0x28] sm:$0xff]
    %v1265 = vld [vmem:[%s13 + $0x30] sm:$0xff]
    %v1266 = vld [vmem:[%s13 + $0x38] sm:$0xff]
    %v1267 = vld [vmem:[%s13 + $0x40] sm:$0xff]
    %v1268 = vld [vmem:[%s13 + $0x48] sm:$0xff]
    %v1269 = vld [vmem:[%s13 + $0x50] sm:$0xff]
    %v1270 = vld [vmem:[%s13 + $0x58] sm:$0xff]
    %v1271 = vld [vmem:[#allocation19] sm:$0x1]
    %v1273 = vlaneseq
    %v1274 = vshrl.u32 %v1273, 7
    %v1275 = vsub.s32 0, %v1274
    %v1276 = vrot.slane %v1271, %v1275
    %v1279 = vsel %vm865, %v1258, 0
    %1281 = vmatprep.subr.mxu0 0.0
    %1282 = vmatpush1.msra.mxu0 %v1259
    %1283 = vmatprep.subr.mxu0 0.0
    %1284 = vmatpush1.msra.mxu0 %v1260
    %1285 = vmatprep.subr.mxu0 0.0
    %1286 = vmatpush1.msra.mxu0 %v1261
    %1287 = vmatprep.subr.mxu0 0.0
    %1288 = vmatpush1.msra.mxu0 %v1262
    %1289 = vmatprep.subr.mxu0 0.0
    %1290 = vmatpush1.msra.mxu0 %v1263
    %1291 = vmatprep.subr.mxu0 0.0
    %1292 = vmatpush1.msra.mxu0 %v1264
    %1293 = vmatprep.subr.mxu0 0.0
    %1294 = vmatpush1.msra.mxu0 %v1265
    %1295 = vmatprep.subr.mxu0 0.0
    %1296 = vmatpush1.msra.mxu0 %v1266
    %1297 = vmatprep.subr.mxu0 0.0
    %1298 = vmatpush1.msra.mxu0 %v1267
    %1299 = vmatprep.subr.mxu0 0.0
    %1300 = vmatpush1.msra.mxu0 %v1268
    %1301 = vmatprep.subr.mxu0 0.0
    %1302 = vmatpush1.msra.mxu0 %v1269
    %1303 = vmatprep.subr.mxu0 0.0
    %1304 = vmatpush1.msra.mxu0 %v1270
    %1305 = vmatprep.subr.mxu0 0.0
    %1306 = vmatpush1.msra.mxu0 0.0
    %1307 = vmatprep.subr.mxu0 0.0
    %1308 = vmatpush1.msra.mxu0 0.0
    %1309 = vmatprep.subr.mxu0 0.0
    %1310 = vmatpush1.msra.mxu0 0.0
    %1311 = vmatprep.subr.mxu0 0.0
    %1312 = vmatpush1.msra.mxu0 0.0
    %1313 = vmatprep.subr.mxu0 0.0
    %1314 = vmatpush1.msra.mxu0 0.0
    %1315 = vmatprep.subr.mxu0 0.0
    %1316 = vmatpush1.msra.mxu0 0.0
    %1317 = vmatprep.subr.mxu0 0.0
    %1318 = vmatpush1.msra.mxu0 0.0
    %1319 = vmatprep.subr.mxu0 0.0
    %1320 = vmatpush1.msra.mxu0 0.0
    %1321 = vmatprep.subr.mxu0 0.0
    %1322 = vmatpush1.msra.mxu0 0.0
    %1323 = vmatprep.subr.mxu0 0.0
    %1324 = vmatpush1.msra.mxu0 0.0
    %1325 = vmatprep.subr.mxu0 0.0
    %1326 = vmatpush1.msra.mxu0 0.0
    %1327 = vmatprep.subr.mxu0 0.0
    %1328 = vmatpush1.msra.mxu0 0.0
    %1329 = vmatprep.subr.mxu0 0.0
    %1330 = vmatpush1.msra.mxu0 0.0
    %1331 = vmatprep.subr.mxu0 0.0
    %1332 = vmatpush1.msra.mxu0 0.0
    %1333 = vmatprep.subr.mxu0 0.0
    %1334 = vmatpush1.msra.mxu0 0.0
    %1335 = vmatprep.subr.mxu0 0.0
    %1336 = vmatpush1.msra.mxu0 0.0
    %1337 = vmatprep.subr.mxu0 0.0
    %1338 = vmatpush1.msra.mxu0 0.0
    %1339 = vmatprep.subr.mxu0 0.0
    %1340 = vmatpush1.msra.mxu0 0.0
    %1341 = vmatprep.subr.mxu0 0.0
    %1342 = vmatpush1.msra.mxu0 0.0
    %1343 = vmatprep.subr.mxu0 0.0
    %1344 = vmatpush1.msra.mxu0 0.0
    %1345 = vmatprep.mubr.f32.mxu0 0.0
    %1346 = vmatmul.mubr.f32.gmra.mrb[0].mxu0 %v1279
    %v1347 = vpop.f32.mrb[0].mxu0
    %v1348 = vadd.f32 %v1276, %v1347
    %v1349 = vpop.f32.mrb[0].mxu0
    %1350 = vdwg.mxu0
    %v1351 = vld [vmem:[#allocation20] sm:$0xff]
    %v1352 = vld [vmem:[#allocation20 + $0x8] sm:$0xff]
    %v1353 = vld [vmem:[#allocation20 + $0x10] sm:$0xff]
    %vm1354 = vcmask 195584
    %v1356 = vsel %vm1354, %v1348, 0
    %1358 = vmatprep.subr.mxu0 0.0
    %1359 = vmatpush1.msra.mxu0 %v1351
    %1360 = vmatprep.subr.mxu0 0.0
    %1361 = vmatpush1.msra.mxu0 %v1352
    %1362 = vmatprep.subr.mxu0 0.0
    %1363 = vmatpush1.msra.mxu0 %v1353
    %1364 = vmatprep.subr.mxu0 0.0
    %1365 = vmatpush1.msra.mxu0 0.0
    %1366 = vmatprep.subr.mxu0 0.0
    %1367 = vmatpush1.msra.mxu0 0.0
    %1368 = vmatprep.subr.mxu0 0.0
    %1369 = vmatpush1.msra.mxu0 0.0
    %1370 = vmatprep.subr.mxu0 0.0
    %1371 = vmatpush1.msra.mxu0 0.0
    %1372 = vmatprep.subr.mxu0 0.0
    %1373 = vmatpush1.msra.mxu0 0.0
    %1374 = vmatprep.subr.mxu0 0.0
    %1375 = vmatpush1.msra.mxu0 0.0
    %1376 = vmatprep.subr.mxu0 0.0
    %1377 = vmatpush1.msra.mxu0 0.0
    %1378 = vmatprep.subr.mxu0 0.0
    %1379 = vmatpush1.msra.mxu0 0.0
    %1380 = vmatprep.subr.mxu0 0.0
    %1381 = vmatpush1.msra.mxu0 0.0
    %1382 = vmatprep.subr.mxu0 0.0
    %1383 = vmatpush1.msra.mxu0 0.0
    %1384 = vmatprep.subr.mxu0 0.0
    %1385 = vmatpush1.msra.mxu0 0.0
    %1386 = vmatprep.subr.mxu0 0.0
    %1387 = vmatpush1.msra.mxu0 0.0
    %1388 = vmatprep.subr.mxu0 0.0
    %1389 = vmatpush1.msra.mxu0 0.0
    %1390 = vmatprep.subr.mxu0 0.0
    %1391 = vmatpush1.msra.mxu0 0.0
    %1392 = vmatprep.subr.mxu0 0.0
    %1393 = vmatpush1.msra.mxu0 0.0
    %1394 = vmatprep.subr.mxu0 0.0
    %1395 = vmatpush1.msra.mxu0 0.0
    %1396 = vmatprep.subr.mxu0 0.0
    %1397 = vmatpush1.msra.mxu0 0.0
    %1398 = vmatprep.subr.mxu0 0.0
    %1399 = vmatpush1.msra.mxu0 0.0
    %1400 = vmatprep.subr.mxu0 0.0
    %1401 = vmatpush1.msra.mxu0 0.0
    %1402 = vmatprep.subr.mxu0 0.0
    %1403 = vmatpush1.msra.mxu0 0.0
    %1404 = vmatprep.subr.mxu0 0.0
    %1405 = vmatpush1.msra.mxu0 0.0
    %1406 = vmatprep.subr.mxu0 0.0
    %1407 = vmatpush1.msra.mxu0 0.0
    %1408 = vmatprep.subr.mxu0 0.0
    %1409 = vmatpush1.msra.mxu0 0.0
    %1410 = vmatprep.subr.mxu0 0.0
    %1411 = vmatpush1.msra.mxu0 0.0
    %1412 = vmatprep.subr.mxu0 0.0
    %1413 = vmatpush1.msra.mxu0 0.0
    %1414 = vmatprep.subr.mxu0 0.0
    %1415 = vmatpush1.msra.mxu0 0.0
    %1416 = vmatprep.subr.mxu0 0.0
    %1417 = vmatpush1.msra.mxu0 0.0
    %1418 = vmatprep.subr.mxu0 0.0
    %1419 = vmatpush1.msra.mxu0 0.0
    %1420 = vmatprep.subr.mxu0 0.0
    %1421 = vmatpush1.msra.mxu0 0.0
    %1422 = vmatprep.mubr.f32.mxu0 0.0
    %1423 = vmatmul.mubr.f32.gmra.mrb[0].mxu0 %v1356
    %v1424 = vpop.f32.mrb[0].mxu0
    %v1425 = vadd.f32 0.0, %v1424
    %v1426 = vpop.f32.mrb[0].mxu0
    %1427 = vdwg.mxu0
    %v1428 = vsel %vm779, %v1425, -inf
    %1429 = vmax.xlane.f32.xlu0 %v1428
    %v1430 = vpop.xlane.xlu0 %1429
    %v1431 = vsub.f32 %v1425, %v1430
    %v1432 = vmul.f32 %v1431, 1.442695
    %v1433 = vpow.pop %v1432
    %v1434 = vld [vmem:[#allocation22] sm:$0xff]
    %v1435 = vld [vmem:[#allocation22 + $0x8] sm:$0xff]
    %v1436 = vld [vmem:[#allocation22 + $0x10] sm:$0xff]
    %v1437 = vld [vmem:[#allocation22 + $0x18] sm:$0xff]
    %v1438 = vld [vmem:[#allocation22 + $0x20] sm:$0xff]
    %v1439 = vld [vmem:[#allocation22 + $0x28] sm:$0xff]
    %v1440 = vld [vmem:[#allocation22 + $0x30] sm:$0xff]
    %v1441 = vld [vmem:[#allocation22 + $0x38] sm:$0xff]
    %v1443 = vsel %vm779, %v1433, 0
    %1445 = vmatprep.subr.mxu0 0.0
    %1446 = vmatpush1.msra.mxu0 %v1434
    %1447 = vmatprep.subr.mxu0 0.0
    %1448 = vmatpush1.msra.mxu0 %v1435
    %1449 = vmatprep.subr.mxu0 0.0
    %1450 = vmatpush1.msra.mxu0 %v1436
    %1451 = vmatprep.subr.mxu0 0.0
    %1452 = vmatpush1.msra.mxu0 %v1437
    %1453 = vmatprep.subr.mxu0 0.0
    %1454 = vmatpush1.msra.mxu0 %v1438
    %1455 = vmatprep.subr.mxu0 0.0
    %1456 = vmatpush1.msra.mxu0 %v1439
    %1457 = vmatprep.subr.mxu0 0.0
    %1458 = vmatpush1.msra.mxu0 %v1440
    %1459 = vmatprep.subr.mxu0 0.0
    %1460 = vmatpush1.msra.mxu0 %v1441
    %1461 = vmatprep.subr.mxu0 0.0
    %1462 = vmatpush1.msra.mxu0 0.0
    %1463 = vmatprep.subr.mxu0 0.0
    %1464 = vmatpush1.msra.mxu0 0.0
    %1465 = vmatprep.subr.mxu0 0.0
    %1466 = vmatpush1.msra.mxu0 0.0
    %1467 = vmatprep.subr.mxu0 0.0
    %1468 = vmatpush1.msra.mxu0 0.0
    %1469 = vmatprep.subr.mxu0 0.0
    %1470 = vmatpush1.msra.mxu0 0.0
    %1471 = vmatprep.subr.mxu0 0.0
    %1472 = vmatpush1.msra.mxu0 0.0
    %1473 = vmatprep.subr.mxu0 0.0
    %1474 = vmatpush1.msra.mxu0 0.0
    %1475 = vmatprep.subr.mxu0 0.0
    %1476 = vmatpush1.msra.mxu0 0.0
    %1477 = vmatprep.subr.mxu0 0.0
    %1478 = vmatpush1.msra.mxu0 0.0
    %1479 = vmatprep.subr.mxu0 0.0
    %1480 = vmatpush1.msra.mxu0 0.0
    %1481 = vmatprep.subr.mxu0 0.0
    %1482 = vmatpush1.msra.mxu0 0.0
    %1483 = vmatprep.subr.mxu0 0.0
    %1484 = vmatpush1.msra.mxu0 0.0
    %1485 = vmatprep.subr.mxu0 0.0
    %1486 = vmatpush1.msra.mxu0 0.0
    %1487 = vmatprep.subr.mxu0 0.0
    %1488 = vmatpush1.msra.mxu0 0.0
    %1489 = vmatprep.subr.mxu0 0.0
    %1490 = vmatpush1.msra.mxu0 0.0
    %1491 = vmatprep.subr.mxu0 0.0
    %1492 = vmatpush1.msra.mxu0 0.0
    %1493 = vmatprep.subr.mxu0 0.0
    %1494 = vmatpush1.msra.mxu0 0.0
    %1495 = vmatprep.subr.mxu0 0.0
    %1496 = vmatpush1.msra.mxu0 0.0
    %1497 = vmatprep.subr.mxu0 0.0
    %1498 = vmatpush1.msra.mxu0 0.0
    %1499 = vmatprep.subr.mxu0 0.0
    %1500 = vmatpush1.msra.mxu0 0.0
    %1501 = vmatprep.subr.mxu0 0.0
    %1502 = vmatpush1.msra.mxu0 0.0
    %1503 = vmatprep.subr.mxu0 0.0
    %1504 = vmatpush1.msra.mxu0 0.0
    %1505 = vmatprep.subr.mxu0 0.0
    %1506 = vmatpush1.msra.mxu0 0.0
    %1507 = vmatprep.subr.mxu0 0.0
    %1508 = vmatpush1.msra.mxu0 0.0
    %1509 = vmatprep.mubr.f32.mxu0 0.0
    %1510 = vmatmul.mubr.f32.gmra.mrb[0].mxu0 %v1443
    %v1511 = vpop.f32.mrb[0].mxu0
    %v1512 = vadd.f32 0.0, %v1511
    %v1513 = vpop.f32.mrb[0].mxu0
    %1514 = vdwg.mxu0
    %v1515 = vrcp.pop %v1512
    %v1516 = vmul.f32 %v1433, %v1515
    %v1517 = vld [vmem:[%s17] sm:$0xff]
    %v1518 = vld [vmem:[%s17 + $0x8] sm:$0xff]
    %v1519 = vld [vmem:[%s17 + $0x10] sm:$0xff]
    %v1520 = vld [vmem:[%s17 + $0x18] sm:$0xff]
    %v1521 = vld [vmem:[%s17 + $0x20] sm:$0xff]
    %v1522 = vld [vmem:[%s17 + $0x28] sm:$0xff]
    %v1523 = vld [vmem:[%s17 + $0x30] sm:$0xff]
    %v1524 = vld [vmem:[%s17 + $0x38] sm:$0xff]
    %v1525 = vld [vmem:[%s17 + $0x40] sm:$0xff]
    %v1526 = vld [vmem:[%s17 + $0x48] sm:$0xff]
    %v1527 = vld [vmem:[%s17 + $0x50] sm:$0xff]
    %v1528 = vld [vmem:[%s17 + $0x58] sm:$0xff]
    %v1529 = vld [vmem:[%s17 + $0x60] sm:$0xff]
    %v1530 = vld [vmem:[%s17 + $0x68] sm:$0xff]
    %v1531 = vld [vmem:[%s17 + $0x70] sm:$0xff]
    %v1532 = vld [vmem:[%s17 + $0x78] sm:$0xff]
    %v1534 = vsel %vm779, %v1516, 0
    %1536 = vmatprep.subr.mxu0 %v1518
    %1537 = vmatpush1.msra.mxu0 %v1517
    %1538 = vmatprep.subr.mxu0 %v1520
    %1539 = vmatpush1.msra.mxu0 %v1519
    %1540 = vmatprep.subr.mxu0 %v1522
    %1541 = vmatpush1.msra.mxu0 %v1521
    %1542 = vmatprep.subr.mxu0 %v1524
    %1543 = vmatpush1.msra.mxu0 %v1523
    %1544 = vmatprep.subr.mxu0 %v1526
    %1545 = vmatpush1.msra.mxu0 %v1525
    %1546 = vmatprep.subr.mxu0 %v1528
    %1547 = vmatpush1.msra.mxu0 %v1527
    %1548 = vmatprep.subr.mxu0 %v1530
    %1549 = vmatpush1.msra.mxu0 %v1529
    %1550 = vmatprep.subr.mxu0 %v1532
    %1551 = vmatpush1.msra.mxu0 %v1531
    %1552 = vmatprep.subr.mxu0 0.0
    %1553 = vmatpush1.msra.mxu0 0.0
    %1554 = vmatprep.subr.mxu0 0.0
    %1555 = vmatpush1.msra.mxu0 0.0
    %1556 = vmatprep.subr.mxu0 0.0
    %1557 = vmatpush1.msra.mxu0 0.0
    %1558 = vmatprep.subr.mxu0 0.0
    %1559 = vmatpush1.msra.mxu0 0.0
    %1560 = vmatprep.subr.mxu0 0.0
    %1561 = vmatpush1.msra.mxu0 0.0
    %1562 = vmatprep.subr.mxu0 0.0
    %1563 = vmatpush1.msra.mxu0 0.0
    %1564 = vmatprep.subr.mxu0 0.0
    %1565 = vmatpush1.msra.mxu0 0.0
    %1566 = vmatprep.subr.mxu0 0.0
    %1567 = vmatpush1.msra.mxu0 0.0
    %1568 = vmatprep.subr.mxu0 0.0
    %1569 = vmatpush1.msra.mxu0 0.0
    %1570 = vmatprep.subr.mxu0 0.0
    %1571 = vmatpush1.msra.mxu0 0.0
    %1572 = vmatprep.subr.mxu0 0.0
    %1573 = vmatpush1.msra.mxu0 0.0
    %1574 = vmatprep.subr.mxu0 0.0
    %1575 = vmatpush1.msra.mxu0 0.0
    %1576 = vmatprep.subr.mxu0 0.0
    %1577 = vmatpush1.msra.mxu0 0.0
    %1578 = vmatprep.subr.mxu0 0.0
    %1579 = vmatpush1.msra.mxu0 0.0
    %1580 = vmatprep.subr.mxu0 0.0
    %1581 = vmatpush1.msra.mxu0 0.0
    %1582 = vmatprep.subr.mxu0 0.0
    %1583 = vmatpush1.msra.mxu0 0.0
    %1584 = vmatprep.subr.mxu0 0.0
    %1585 = vmatpush1.msra.mxu0 0.0
    %1586 = vmatprep.subr.mxu0 0.0
    %1587 = vmatpush1.msra.mxu0 0.0
    %1588 = vmatprep.subr.mxu0 0.0
    %1589 = vmatpush1.msra.mxu0 0.0
    %1590 = vmatprep.subr.mxu0 0.0
    %1591 = vmatpush1.msra.mxu0 0.0
    %1592 = vmatprep.subr.mxu0 0.0
    %1593 = vmatpush1.msra.mxu0 0.0
    %1594 = vmatprep.subr.mxu0 0.0
    %1595 = vmatpush1.msra.mxu0 0.0
    %1596 = vmatprep.subr.mxu0 0.0
    %1597 = vmatpush1.msra.mxu0 0.0
    %1598 = vmatprep.subr.mxu0 0.0
    %1599 = vmatpush1.msra.mxu0 0.0
    %1600 = vmatprep.mubr.f32.mxu0 0.0
    %1601 = vmatmul.mubr.f32.gmra.mrb[0].mxu0 %v1534
    %v1602 = vpop.f32.mrb[0].mxu0
    %v1603 = vadd.f32 0.0, %v1602
    %v1604 = vpop.f32.mrb[0].mxu0
    %v1605 = vadd.f32 0.0, %v1604
    %1606 = vdwg.mxu0
    %v1607 = vld [vmem:[#allocation23] sm:$0xff]
    %v1608 = vld [vmem:[#allocation23 + $0x8] sm:$0xff]
    %v1609 = vld [vmem:[#allocation23 + $0x10] sm:$0xff]
    %v1610 = vld [vmem:[#allocation23 + $0x18] sm:$0xff]
    %v1611 = vld [vmem:[#allocation23 + $0x20] sm:$0xff]
    %v1612 = vld [vmem:[#allocation23 + $0x28] sm:$0xff]
    %v1613 = vld [vmem:[#allocation23 + $0x30] sm:$0xff]
    %v1614 = vld [vmem:[#allocation23 + $0x38] sm:$0xff]
    %v1615 = vld [vmem:[#allocation23 + $0x40] sm:$0xff]
    %v1616 = vld [vmem:[#allocation23 + $0x48] sm:$0xff]
    %v1617 = vld [vmem:[#allocation23 + $0x50] sm:$0xff]
    %v1618 = vld [vmem:[#allocation23 + $0x58] sm:$0xff]
    %v1619 = vld [vmem:[#allocation23 + $0x60] sm:$0xff]
    %v1620 = vld [vmem:[#allocation23 + $0x68] sm:$0xff]
    %v1621 = vld [vmem:[#allocation23 + $0x70] sm:$0xff]
    %v1622 = vld [vmem:[#allocation23 + $0x78] sm:$0xff]
    %v1623 = vld [vmem:[#allocation23 + $0x80] sm:$0xff]
    %v1624 = vld [vmem:[#allocation23 + $0x88] sm:$0xff]
    %v1625 = vld [vmem:[#allocation23 + $0x90] sm:$0xff]
    %v1626 = vld [vmem:[#allocation23 + $0x98] sm:$0xff]
    %v1627 = vld [vmem:[#allocation23 + $0xa0] sm:$0xff]
    %v1628 = vld [vmem:[#allocation23 + $0xa8] sm:$0xff]
    %v1629 = vld [vmem:[#allocation23 + $0xb0] sm:$0xff]
    %v1630 = vld [vmem:[#allocation23 + $0xb8] sm:$0xff]
    %v1631 = vld [vmem:[#allocation23 + $0xc0] sm:$0xff]
    %v1632 = vld [vmem:[#allocation23 + $0xc8] sm:$0xff]
    %v1633 = vld [vmem:[#allocation23 + $0xd0] sm:$0xff]
    %v1634 = vld [vmem:[#allocation23 + $0xd8] sm:$0xff]
    %v1635 = vld [vmem:[#allocation23 + $0xe0] sm:$0xff]
    %v1636 = vld [vmem:[#allocation23 + $0xe8] sm:$0xff]
    %v1637 = vld [vmem:[#allocation23 + $0xf0] sm:$0xff]
    %v1638 = vld [vmem:[#allocation23 + $0xf8] sm:$0xff]
    %v1639 = vld [vmem:[#allocation23 + $0x100] sm:$0xff]
    %v1640 = vld [vmem:[#allocation23 + $0x108] sm:$0xff]
    %v1641 = vld [vmem:[#allocation23 + $0x110] sm:$0xff]
    %v1642 = vld [vmem:[#allocation23 + $0x118] sm:$0xff]
    %v1643 = vld [vmem:[#allocation23 + $0x120] sm:$0xff]
    %v1644 = vld [vmem:[#allocation23 + $0x128] sm:$0xff]
    %v1645 = vld [vmem:[#allocation23 + $0x130] sm:$0xff]
    %v1646 = vld [vmem:[#allocation23 + $0x138] sm:$0xff]
    %v1647 = vld [vmem:[#allocation23 + $0x140] sm:$0xff]
    %v1648 = vld [vmem:[#allocation23 + $0x148] sm:$0xff]
    %v1649 = vld [vmem:[#allocation23 + $0x150] sm:$0xff]
    %v1650 = vld [vmem:[#allocation23 + $0x158] sm:$0xff]
    %v1651 = vld [vmem:[#allocation23 + $0x160] sm:$0xff]
    %v1652 = vld [vmem:[#allocation23 + $0x168] sm:$0xff]
    %v1653 = vld [vmem:[#allocation23 + $0x170] sm:$0xff]
    %v1654 = vld [vmem:[#allocation23 + $0x178] sm:$0xff]
    %v1655 = vld [vmem:[#allocation23 + $0x180] sm:$0xff]
    %v1656 = vld [vmem:[#allocation23 + $0x188] sm:$0xff]
    %v1657 = vld [vmem:[#allocation23 + $0x190] sm:$0xff]
    %v1658 = vld [vmem:[#allocation23 + $0x198] sm:$0xff]
    %v1659 = vld [vmem:[#allocation23 + $0x1a0] sm:$0xff]
    %v1660 = vld [vmem:[#allocation23 + $0x1a8] sm:$0xff]
    %v1661 = vld [vmem:[#allocation23 + $0x1b0] sm:$0xff]
    %v1662 = vld [vmem:[#allocation23 + $0x1b8] sm:$0xff]
    %v1663 = vld [vmem:[#allocation23 + $0x1c0] sm:$0xff]
    %v1664 = vld [vmem:[#allocation23 + $0x1c8] sm:$0xff]
    %v1665 = vld [vmem:[#allocation23 + $0x1d0] sm:$0xff]
    %v1666 = vld [vmem:[#allocation23 + $0x1d8] sm:$0xff]
    %v1667 = vld [vmem:[#allocation23 + $0x1e0] sm:$0xff]
    %v1668 = vld [vmem:[#allocation23 + $0x1e8] sm:$0xff]
    %v1669 = vld [vmem:[#allocation23 + $0x1f0] sm:$0xff]
    %v1670 = vld [vmem:[#allocation23 + $0x1f8] sm:$0xff]
    %1671 = vmatprep.subr.mxu0 %v1608
    %1672 = vmatpush1.msra.mxu0 %v1607
    %1673 = vmatprep.subr.mxu0 %v1610
    %1674 = vmatpush1.msra.mxu0 %v1609
    %1675 = vmatprep.subr.mxu0 %v1612
    %1676 = vmatpush1.msra.mxu0 %v1611
    %1677 = vmatprep.subr.mxu0 %v1614
    %1678 = vmatpush1.msra.mxu0 %v1613
    %1679 = vmatprep.subr.mxu0 %v1616
    %1680 = vmatpush1.msra.mxu0 %v1615
    %1681 = vmatprep.subr.mxu0 %v1618
    %1682 = vmatpush1.msra.mxu0 %v1617
    %1683 = vmatprep.subr.mxu0 %v1620
    %1684 = vmatpush1.msra.mxu0 %v1619
    %1685 = vmatprep.subr.mxu0 %v1622
    %1686 = vmatpush1.msra.mxu0 %v1621
    %1687 = vmatprep.subr.mxu0 %v1624
    %1688 = vmatpush1.msra.mxu0 %v1623
    %1689 = vmatprep.subr.mxu0 %v1626
    %1690 = vmatpush1.msra.mxu0 %v1625
    %1691 = vmatprep.subr.mxu0 %v1628
    %1692 = vmatpush1.msra.mxu0 %v1627
    %1693 = vmatprep.subr.mxu0 %v1630
    %1694 = vmatpush1.msra.mxu0 %v1629
    %1695 = vmatprep.subr.mxu0 %v1632
    %1696 = vmatpush1.msra.mxu0 %v1631
    %1697 = vmatprep.subr.mxu0 %v1634
    %1698 = vmatpush1.msra.mxu0 %v1633
    %1699 = vmatprep.subr.mxu0 %v1636
    %1700 = vmatpush1.msra.mxu0 %v1635
    %1701 = vmatprep.subr.mxu0 %v1638
    %1702 = vmatpush1.msra.mxu0 %v1637
    %1703 = vmatprep.subr.mxu0 %v1640
    %1704 = vmatpush1.msra.mxu0 %v1639
    %1705 = vmatprep.subr.mxu0 %v1642
    %1706 = vmatpush1.msra.mxu0 %v1641
    %1707 = vmatprep.subr.mxu0 %v1644
    %1708 = vmatpush1.msra.mxu0 %v1643
    %1709 = vmatprep.subr.mxu0 %v1646
    %1710 = vmatpush1.msra.mxu0 %v1645
    %1711 = vmatprep.subr.mxu0 %v1648
    %1712 = vmatpush1.msra.mxu0 %v1647
    %1713 = vmatprep.subr.mxu0 %v1650
    %1714 = vmatpush1.msra.mxu0 %v1649
    %1715 = vmatprep.subr.mxu0 %v1652
    %1716 = vmatpush1.msra.mxu0 %v1651
    %1717 = vmatprep.subr.mxu0 %v1654
    %1718 = vmatpush1.msra.mxu0 %v1653
    %1719 = vmatprep.subr.mxu0 %v1656
    %1720 = vmatpush1.msra.mxu0 %v1655
    %1721 = vmatprep.subr.mxu0 %v1658
    %1722 = vmatpush1.msra.mxu0 %v1657
    %1723 = vmatprep.subr.mxu0 %v1660
    %1724 = vmatpush1.msra.mxu0 %v1659
    %1725 = vmatprep.subr.mxu0 %v1662
    %1726 = vmatpush1.msra.mxu0 %v1661
    %1727 = vmatprep.subr.mxu0 %v1664
    %1728 = vmatpush1.msra.mxu0 %v1663
    %1729 = vmatprep.subr.mxu0 %v1666
    %1730 = vmatpush1.msra.mxu0 %v1665
    %1731 = vmatprep.subr.mxu0 %v1668
    %1732 = vmatpush1.msra.mxu0 %v1667
    %1733 = vmatprep.subr.mxu0 %v1670
    %1734 = vmatpush1.msra.mxu0 %v1669
    %1735 = vmatprep.mubr.f32.mxu0 %v1605
    %1736 = vmatmul.mubr.f32.gmra.mrb[0].mxu0 %v1603
    %v1737 = vpop.f32.mrb[0].mxu0
    %v1738 = vadd.f32 0.0, %v1737
    %v1739 = vpop.f32.mrb[0].mxu0
    %v1740 = vadd.f32 0.0, %v1739
    %1741 = vdwg.mxu0
    %v1742 = vsub.f32 %v1603, %v1738
    %v1743 = vsub.f32 %v1605, %v1740
    %v1744 = vmul.f32 %v1742, %v1742
    %v1745 = vmul.f32 %v1743, %v1743
    %1746 = vmatprep.subr.mxu0 %v1608
    %1747 = vmatpush1.msra.mxu0 %v1607
    %1748 = vmatprep.subr.mxu0 %v1610
    %1749 = vmatpush1.msra.mxu0 %v1609
    %1750 = vmatprep.subr.mxu0 %v1612
    %1751 = vmatpush1.msra.mxu0 %v1611
    %1752 = vmatprep.subr.mxu0 %v1614
    %1753 = vmatpush1.msra.mxu0 %v1613
    %1754 = vmatprep.subr.mxu0 %v1616
    %1755 = vmatpush1.msra.mxu0 %v1615
    %1756 = vmatprep.subr.mxu0 %v1618
    %1757 = vmatpush1.msra.mxu0 %v1617
    %1758 = vmatprep.subr.mxu0 %v1620
    %1759 = vmatpush1.msra.mxu0 %v1619
    %1760 = vmatprep.subr.mxu0 %v1622
    %1761 = vmatpush1.msra.mxu0 %v1621
    %1762 = vmatprep.subr.mxu0 %v1624
    %1763 = vmatpush1.msra.mxu0 %v1623
    %1764 = vmatprep.subr.mxu0 %v1626
    %1765 = vmatpush1.msra.mxu0 %v1625
    %1766 = vmatprep.subr.mxu0 %v1628
    %1767 = vmatpush1.msra.mxu0 %v1627
    %1768 = vmatprep.subr.mxu0 %v1630
    %1769 = vmatpush1.msra.mxu0 %v1629
    %1770 = vmatprep.subr.mxu0 %v1632
    %1771 = vmatpush1.msra.mxu0 %v1631
    %1772 = vmatprep.subr.mxu0 %v1634
    %1773 = vmatpush1.msra.mxu0 %v1633
    %1774 = vmatprep.subr.mxu0 %v1636
    %1775 = vmatpush1.msra.mxu0 %v1635
    %1776 = vmatprep.subr.mxu0 %v1638
    %1777 = vmatpush1.msra.mxu0 %v1637
    %1778 = vmatprep.subr.mxu0 %v1640
    %1779 = vmatpush1.msra.mxu0 %v1639
    %1780 = vmatprep.subr.mxu0 %v1642
    %1781 = vmatpush1.msra.mxu0 %v1641
    %1782 = vmatprep.subr.mxu0 %v1644
    %1783 = vmatpush1.msra.mxu0 %v1643
    %1784 = vmatprep.subr.mxu0 %v1646
    %1785 = vmatpush1.msra.mxu0 %v1645
    %1786 = vmatprep.subr.mxu0 %v1648
    %1787 = vmatpush1.msra.mxu0 %v1647
    %1788 = vmatprep.subr.mxu0 %v1650
    %1789 = vmatpush1.msra.mxu0 %v1649
    %1790 = vmatprep.subr.mxu0 %v1652
    %1791 = vmatpush1.msra.mxu0 %v1651
    %1792 = vmatprep.subr.mxu0 %v1654
    %1793 = vmatpush1.msra.mxu0 %v1653
    %1794 = vmatprep.subr.mxu0 %v1656
    %1795 = vmatpush1.msra.mxu0 %v1655
    %1796 = vmatprep.subr.mxu0 %v1658
    %1797 = vmatpush1.msra.mxu0 %v1657
    %1798 = vmatprep.subr.mxu0 %v1660
    %1799 = vmatpush1.msra.mxu0 %v1659
    %1800 = vmatprep.subr.mxu0 %v1662
    %1801 = vmatpush1.msra.mxu0 %v1661
    %1802 = vmatprep.subr.mxu0 %v1664
    %1803 = vmatpush1.msra.mxu0 %v1663
    %1804 = vmatprep.subr.mxu0 %v1666
    %1805 = vmatpush1.msra.mxu0 %v1665
    %1806 = vmatprep.subr.mxu0 %v1668
    %1807 = vmatpush1.msra.mxu0 %v1667
    %1808 = vmatprep.subr.mxu0 %v1670
    %1809 = vmatpush1.msra.mxu0 %v1669
    %1810 = vmatprep.mubr.f32.mxu0 %v1745
    %1811 = vmatmul.mubr.f32.gmra.mrb[0].mxu0 %v1744
    %v1812 = vpop.f32.mrb[0].mxu0
    %v1813 = vadd.f32 1e-05, %v1812
    %v1814 = vpop.f32.mrb[0].mxu0
    %v1815 = vadd.f32 1e-05, %v1814
    %1816 = vdwg.mxu0
    %v1817 = vrsqrt.pop %v1813
    %v1818 = vrsqrt.pop %v1815
    %v1819 = vmul.f32 %v1742, %v1817
    %v1820 = vmul.f32 %v1743, %v1818
    %v1821 = vld [vmem:[#allocation25] sm:$0xff]
    %v1822 = vld [vmem:[#allocation25 + $0x8] sm:$0xff]
    %v1823 = vld [vmem:[#allocation25 + $0x10] sm:$0xff]
    %v1824 = vld [vmem:[#allocation25 + $0x18] sm:$0xff]
    %v1825 = vld [vmem:[#allocation25 + $0x20] sm:$0xff]
    %v1826 = vld [vmem:[#allocation25 + $0x28] sm:$0xff]
    %v1827 = vld [vmem:[#allocation25 + $0x30] sm:$0xff]
    %v1828 = vld [vmem:[#allocation25 + $0x38] sm:$0xff]
    %v1829 = vld [vmem:[#allocation25 + $0x40] sm:$0xff]
    %v1830 = vld [vmem:[#allocation25 + $0x48] sm:$0xff]
    %v1831 = vld [vmem:[#allocation25 + $0x50] sm:$0xff]
    %v1832 = vld [vmem:[#allocation25 + $0x58] sm:$0xff]
    %v1833 = vld [vmem:[#allocation25 + $0x60] sm:$0xff]
    %v1834 = vld [vmem:[#allocation25 + $0x68] sm:$0xff]
    %v1835 = vld [vmem:[#allocation25 + $0x70] sm:$0xff]
    %v1836 = vld [vmem:[#allocation25 + $0x78] sm:$0xff]
    %v1837 = vld [vmem:[#allocation25 + $0x80] sm:$0xff]
    %v1838 = vld [vmem:[#allocation25 + $0x88] sm:$0xff]
    %v1839 = vld [vmem:[#allocation25 + $0x90] sm:$0xff]
    %v1840 = vld [vmem:[#allocation25 + $0x98] sm:$0xff]
    %v1841 = vld [vmem:[#allocation25 + $0xa0] sm:$0xff]
    %v1842 = vld [vmem:[#allocation25 + $0xa8] sm:$0xff]
    %v1843 = vld [vmem:[#allocation25 + $0xb0] sm:$0xff]
    %v1844 = vld [vmem:[#allocation25 + $0xb8] sm:$0xff]
    %v1845 = vld [vmem:[#allocation25 + $0xc0] sm:$0xff]
    %v1846 = vld [vmem:[#allocation25 + $0xc8] sm:$0xff]
    %v1847 = vld [vmem:[#allocation25 + $0xd0] sm:$0xff]
    %v1848 = vld [vmem:[#allocation25 + $0xd8] sm:$0xff]
    %v1849 = vld [vmem:[#allocation25 + $0xe0] sm:$0xff]
    %v1850 = vld [vmem:[#allocation25 + $0xe8] sm:$0xff]
    %v1851 = vld [vmem:[#allocation25 + $0xf0] sm:$0xff]
    %v1852 = vld [vmem:[#allocation25 + $0xf8] sm:$0xff]
    %v1853 = vld [vmem:[#allocation25 + $0x100] sm:$0xff]
    %v1854 = vld [vmem:[#allocation25 + $0x108] sm:$0xff]
    %v1855 = vld [vmem:[#allocation25 + $0x110] sm:$0xff]
    %v1856 = vld [vmem:[#allocation25 + $0x118] sm:$0xff]
    %v1857 = vld [vmem:[#allocation25 + $0x120] sm:$0xff]
    %v1858 = vld [vmem:[#allocation25 + $0x128] sm:$0xff]
    %v1859 = vld [vmem:[#allocation25 + $0x130] sm:$0xff]
    %v1860 = vld [vmem:[#allocation25 + $0x138] sm:$0xff]
    %v1861 = vld [vmem:[#allocation25 + $0x140] sm:$0xff]
    %v1862 = vld [vmem:[#allocation25 + $0x148] sm:$0xff]
    %v1863 = vld [vmem:[#allocation25 + $0x150] sm:$0xff]
    %v1864 = vld [vmem:[#allocation25 + $0x158] sm:$0xff]
    %v1865 = vld [vmem:[#allocation25 + $0x160] sm:$0xff]
    %v1866 = vld [vmem:[#allocation25 + $0x168] sm:$0xff]
    %v1867 = vld [vmem:[#allocation25 + $0x170] sm:$0xff]
    %v1868 = vld [vmem:[#allocation25 + $0x178] sm:$0xff]
    %v1869 = vld [vmem:[#allocation25 + $0x180] sm:$0xff]
    %v1870 = vld [vmem:[#allocation25 + $0x188] sm:$0xff]
    %v1871 = vld [vmem:[#allocation25 + $0x190] sm:$0xff]
    %v1872 = vld [vmem:[#allocation25 + $0x198] sm:$0xff]
    %v1873 = vld [vmem:[#allocation25 + $0x1a0] sm:$0xff]
    %v1874 = vld [vmem:[#allocation25 + $0x1a8] sm:$0xff]
    %v1875 = vld [vmem:[#allocation25 + $0x1b0] sm:$0xff]
    %v1876 = vld [vmem:[#allocation25 + $0x1b8] sm:$0xff]
    %v1877 = vld [vmem:[#allocation25 + $0x1c0] sm:$0xff]
    %v1878 = vld [vmem:[#allocation25 + $0x1c8] sm:$0xff]
    %v1879 = vld [vmem:[#allocation25 + $0x1d0] sm:$0xff]
    %v1880 = vld [vmem:[#allocation25 + $0x1d8] sm:$0xff]
    %v1881 = vld [vmem:[#allocation25 + $0x1e0] sm:$0xff]
    %v1882 = vld [vmem:[#allocation25 + $0x1e8] sm:$0xff]
    %v1883 = vld [vmem:[#allocation25 + $0x1f0] sm:$0xff]
    %v1884 = vld [vmem:[#allocation25 + $0x1f8] sm:$0xff]
    %v1885 = vld [vmem:[%s20] sm:$0x3]
    %v1887 = vlaneseq
    %v1888 = vshrl.u32 %v1887, 7
    %v1889 = vsub.s32 0, %v1888
    %v1890 = vrot.slane %v1885, %v1889
    %v1891 = vlaneseq
    %v1892 = vshrl.u32 %v1891, 7
    %v1893 = vsub.s32 1, %v1892
    %v1894 = vrot.slane %v1885, %v1893
    %1897 = vmatprep.subr.mxu0 %v1822
    %1898 = vmatpush1.msra.mxu0 %v1821
    %1899 = vmatprep.subr.mxu0 %v1824
    %1900 = vmatpush1.msra.mxu0 %v1823
    %1901 = vmatprep.subr.mxu0 %v1826
    %1902 = vmatpush1.msra.mxu0 %v1825
    %1903 = vmatprep.subr.mxu0 %v1828
    %1904 = vmatpush1.msra.mxu0 %v1827
    %1905 = vmatprep.subr.mxu0 %v1830
    %1906 = vmatpush1.msra.mxu0 %v1829
    %1907 = vmatprep.subr.mxu0 %v1832
    %1908 = vmatpush1.msra.mxu0 %v1831
    %1909 = vmatprep.subr.mxu0 %v1834
    %1910 = vmatpush1.msra.mxu0 %v1833
    %1911 = vmatprep.subr.mxu0 %v1836
    %1912 = vmatpush1.msra.mxu0 %v1835
    %1913 = vmatprep.subr.mxu0 %v1838
    %1914 = vmatpush1.msra.mxu0 %v1837
    %1915 = vmatprep.subr.mxu0 %v1840
    %1916 = vmatpush1.msra.mxu0 %v1839
    %1917 = vmatprep.subr.mxu0 %v1842
    %1918 = vmatpush1.msra.mxu0 %v1841
    %1919 = vmatprep.subr.mxu0 %v1844
    %1920 = vmatpush1.msra.mxu0 %v1843
    %1921 = vmatprep.subr.mxu0 %v1846
    %1922 = vmatpush1.msra.mxu0 %v1845
    %1923 = vmatprep.subr.mxu0 %v1848
    %1924 = vmatpush1.msra.mxu0 %v1847
    %1925 = vmatprep.subr.mxu0 %v1850
    %1926 = vmatpush1.msra.mxu0 %v1849
    %1927 = vmatprep.subr.mxu0 %v1852
    %1928 = vmatpush1.msra.mxu0 %v1851
    %1929 = vmatprep.subr.mxu0 %v1854
    %1930 = vmatpush1.msra.mxu0 %v1853
    %1931 = vmatprep.subr.mxu0 %v1856
    %1932 = vmatpush1.msra.mxu0 %v1855
    %1933 = vmatprep.subr.mxu0 %v1858
    %1934 = vmatpush1.msra.mxu0 %v1857
    %1935 = vmatprep.subr.mxu0 %v1860
    %1936 = vmatpush1.msra.mxu0 %v1859
    %1937 = vmatprep.subr.mxu0 %v1862
    %1938 = vmatpush1.msra.mxu0 %v1861
    %1939 = vmatprep.subr.mxu0 %v1864
    %1940 = vmatpush1.msra.mxu0 %v1863
    %1941 = vmatprep.subr.mxu0 %v1866
    %1942 = vmatpush1.msra.mxu0 %v1865
    %1943 = vmatprep.subr.mxu0 %v1868
    %1944 = vmatpush1.msra.mxu0 %v1867
    %1945 = vmatprep.subr.mxu0 %v1870
    %1946 = vmatpush1.msra.mxu0 %v1869
    %1947 = vmatprep.subr.mxu0 %v1872
    %1948 = vmatpush1.msra.mxu0 %v1871
    %1949 = vmatprep.subr.mxu0 %v1874
    %1950 = vmatpush1.msra.mxu0 %v1873
    %1951 = vmatprep.subr.mxu0 %v1876
    %1952 = vmatpush1.msra.mxu0 %v1875
    %1953 = vmatprep.subr.mxu0 %v1878
    %1954 = vmatpush1.msra.mxu0 %v1877
    %1955 = vmatprep.subr.mxu0 %v1880
    %1956 = vmatpush1.msra.mxu0 %v1879
    %1957 = vmatprep.subr.mxu0 %v1882
    %1958 = vmatpush1.msra.mxu0 %v1881
    %1959 = vmatprep.subr.mxu0 %v1884
    %1960 = vmatpush1.msra.mxu0 %v1883
    %1961 = vmatprep.mubr.f32.mxu0 %v1820
    %1962 = vmatmul.mubr.f32.gmra.mrb[0].mxu0 %v1819
    %v1963 = vpop.f32.mrb[0].mxu0
    %v1964 = vadd.f32 %v1890, %v1963
    %v1965 = vpop.f32.mrb[0].mxu0
    %v1966 = vadd.f32 %v1894, %v1965
    %1967 = vdwg.mxu0
    %v1968 = vmax.f32 %v1964, 0.0
    %v1969 = vmax.f32 %v1966, 0.0
    %1970 = vmatprep.subr.mxu0 %v1608
    %1971 = vmatpush1.msra.mxu0 %v1607
    %1972 = vmatprep.subr.mxu0 %v1610
    %1973 = vmatpush1.msra.mxu0 %v1609
    %1974 = vmatprep.subr.mxu0 %v1612
    %1975 = vmatpush1.msra.mxu0 %v1611
    %1976 = vmatprep.subr.mxu0 %v1614
    %1977 = vmatpush1.msra.mxu0 %v1613
    %1978 = vmatprep.subr.mxu0 %v1616
    %1979 = vmatpush1.msra.mxu0 %v1615
    %1980 = vmatprep.subr.mxu0 %v1618
    %1981 = vmatpush1.msra.mxu0 %v1617
    %1982 = vmatprep.subr.mxu0 %v1620
    %1983 = vmatpush1.msra.mxu0 %v1619
    %1984 = vmatprep.subr.mxu0 %v1622
    %1985 = vmatpush1.msra.mxu0 %v1621
    %1986 = vmatprep.subr.mxu0 %v1624
    %1987 = vmatpush1.msra.mxu0 %v1623
    %1988 = vmatprep.subr.mxu0 %v1626
    %1989 = vmatpush1.msra.mxu0 %v1625
    %1990 = vmatprep.subr.mxu0 %v1628
    %1991 = vmatpush1.msra.mxu0 %v1627
    %1992 = vmatprep.subr.mxu0 %v1630
    %1993 = vmatpush1.msra.mxu0 %v1629
    %1994 = vmatprep.subr.mxu0 %v1632
    %1995 = vmatpush1.msra.mxu0 %v1631
    %1996 = vmatprep.subr.mxu0 %v1634
    %1997 = vmatpush1.msra.mxu0 %v1633
    %1998 = vmatprep.subr.mxu0 %v1636
    %1999 = vmatpush1.msra.mxu0 %v1635
    %2000 = vmatprep.subr.mxu0 %v1638
    %2001 = vmatpush1.msra.mxu0 %v1637
    %2002 = vmatprep.subr.mxu0 %v1640
    %2003 = vmatpush1.msra.mxu0 %v1639
    %2004 = vmatprep.subr.mxu0 %v1642
    %2005 = vmatpush1.msra.mxu0 %v1641
    %2006 = vmatprep.subr.mxu0 %v1644
    %2007 = vmatpush1.msra.mxu0 %v1643
    %2008 = vmatprep.subr.mxu0 %v1646
    %2009 = vmatpush1.msra.mxu0 %v1645
    %2010 = vmatprep.subr.mxu0 %v1648
    %2011 = vmatpush1.msra.mxu0 %v1647
    %2012 = vmatprep.subr.mxu0 %v1650
    %2013 = vmatpush1.msra.mxu0 %v1649
    %2014 = vmatprep.subr.mxu0 %v1652
    %2015 = vmatpush1.msra.mxu0 %v1651
    %2016 = vmatprep.subr.mxu0 %v1654
    %2017 = vmatpush1.msra.mxu0 %v1653
    %2018 = vmatprep.subr.mxu0 %v1656
    %2019 = vmatpush1.msra.mxu0 %v1655
    %2020 = vmatprep.subr.mxu0 %v1658
    %2021 = vmatpush1.msra.mxu0 %v1657
    %2022 = vmatprep.subr.mxu0 %v1660
    %2023 = vmatpush1.msra.mxu0 %v1659
    %2024 = vmatprep.subr.mxu0 %v1662
    %2025 = vmatpush1.msra.mxu0 %v1661
    %2026 = vmatprep.subr.mxu0 %v1664
    %2027 = vmatpush1.msra.mxu0 %v1663
    %2028 = vmatprep.subr.mxu0 %v1666
    %2029 = vmatpush1.msra.mxu0 %v1665
    %2030 = vmatprep.subr.mxu0 %v1668
    %2031 = vmatpush1.msra.mxu0 %v1667
    %2032 = vmatprep.subr.mxu0 %v1670
    %2033 = vmatpush1.msra.mxu0 %v1669
    %2034 = vmatprep.mubr.f32.mxu0 %v1969
    %2035 = vmatmul.mubr.f32.gmra.mrb[0].mxu0 %v1968
    %v2036 = vpop.f32.mrb[0].mxu0
    %v2037 = vadd.f32 0.0, %v2036
    %v2038 = vpop.f32.mrb[0].mxu0
    %v2039 = vadd.f32 0.0, %v2038
    %2040 = vdwg.mxu0
    %v2041 = vsub.f32 %v1968, %v2037
    %v2042 = vsub.f32 %v1969, %v2039
    %v2043 = vmul.f32 %v2041, %v2041
    %v2044 = vmul.f32 %v2042, %v2042
    %2045 = vmatprep.subr.mxu0 %v1608
    %2046 = vmatpush1.msra.mxu0 %v1607
    %2047 = vmatprep.subr.mxu0 %v1610
    %2048 = vmatpush1.msra.mxu0 %v1609
    %2049 = vmatprep.subr.mxu0 %v1612
    %2050 = vmatpush1.msra.mxu0 %v1611
    %2051 = vmatprep.subr.mxu0 %v1614
    %2052 = vmatpush1.msra.mxu0 %v1613
    %2053 = vmatprep.subr.mxu0 %v1616
    %2054 = vmatpush1.msra.mxu0 %v1615
    %2055 = vmatprep.subr.mxu0 %v1618
    %2056 = vmatpush1.msra.mxu0 %v1617
    %2057 = vmatprep.subr.mxu0 %v1620
    %2058 = vmatpush1.msra.mxu0 %v1619
    %2059 = vmatprep.subr.mxu0 %v1622
    %2060 = vmatpush1.msra.mxu0 %v1621
    %2061 = vmatprep.subr.mxu0 %v1624
    %2062 = vmatpush1.msra.mxu0 %v1623
    %2063 = vmatprep.subr.mxu0 %v1626
    %2064 = vmatpush1.msra.mxu0 %v1625
    %2065 = vmatprep.subr.mxu0 %v1628
    %2066 = vmatpush1.msra.mxu0 %v1627
    %2067 = vmatprep.subr.mxu0 %v1630
    %2068 = vmatpush1.msra.mxu0 %v1629
    %2069 = vmatprep.subr.mxu0 %v1632
    %2070 = vmatpush1.msra.mxu0 %v1631
    %2071 = vmatprep.subr.mxu0 %v1634
    %2072 = vmatpush1.msra.mxu0 %v1633
    %2073 = vmatprep.subr.mxu0 %v1636
    %2074 = vmatpush1.msra.mxu0 %v1635
    %2075 = vmatprep.subr.mxu0 %v1638
    %2076 = vmatpush1.msra.mxu0 %v1637
    %2077 = vmatprep.subr.mxu0 %v1640
    %2078 = vmatpush1.msra.mxu0 %v1639
    %2079 = vmatprep.subr.mxu0 %v1642
    %2080 = vmatpush1.msra.mxu0 %v1641
    %2081 = vmatprep.subr.mxu0 %v1644
    %2082 = vmatpush1.msra.mxu0 %v1643
    %2083 = vmatprep.subr.mxu0 %v1646
    %2084 = vmatpush1.msra.mxu0 %v1645
    %2085 = vmatprep.subr.mxu0 %v1648
    %2086 = vmatpush1.msra.mxu0 %v1647
    %2087 = vmatprep.subr.mxu0 %v1650
    %2088 = vmatpush1.msra.mxu0 %v1649
    %2089 = vmatprep.subr.mxu0 %v1652
    %2090 = vmatpush1.msra.mxu0 %v1651
    %2091 = vmatprep.subr.mxu0 %v1654
    %2092 = vmatpush1.msra.mxu0 %v1653
    %2093 = vmatprep.subr.mxu0 %v1656
    %2094 = vmatpush1.msra.mxu0 %v1655
    %2095 = vmatprep.subr.mxu0 %v1658
    %2096 = vmatpush1.msra.mxu0 %v1657
    %2097 = vmatprep.subr.mxu0 %v1660
    %2098 = vmatpush1.msra.mxu0 %v1659
    %2099 = vmatprep.subr.mxu0 %v1662
    %2100 = vmatpush1.msra.mxu0 %v1661
    %2101 = vmatprep.subr.mxu0 %v1664
    %2102 = vmatpush1.msra.mxu0 %v1663
    %2103 = vmatprep.subr.mxu0 %v1666
    %2104 = vmatpush1.msra.mxu0 %v1665
    %2105 = vmatprep.subr.mxu0 %v1668
    %2106 = vmatpush1.msra.mxu0 %v1667
    %2107 = vmatprep.subr.mxu0 %v1670
    %2108 = vmatpush1.msra.mxu0 %v1669
    %2109 = vmatprep.mubr.f32.mxu0 %v2044
    %2110 = vmatmul.mubr.f32.gmra.mrb[0].mxu0 %v2043
    %v2111 = vpop.f32.mrb[0].mxu0
    %v2112 = vadd.f32 1e-05, %v2111
    %v2113 = vpop.f32.mrb[0].mxu0
    %v2114 = vadd.f32 1e-05, %v2113
    %2115 = vdwg.mxu0
    %v2116 = vrsqrt.pop %v2112
    %v2117 = vrsqrt.pop %v2114
    %v2118 = vmul.f32 %v2041, %v2116
    %v2119 = vmul.f32 %v2042, %v2117
    %v2120 = vld [vmem:[#allocation26] sm:$0xff]
    %v2121 = vld [vmem:[#allocation26 + $0x8] sm:$0xff]
    %v2122 = vld [vmem:[#allocation26 + $0x10] sm:$0xff]
    %v2123 = vld [vmem:[#allocation26 + $0x18] sm:$0xff]
    %v2124 = vld [vmem:[#allocation26 + $0x20] sm:$0xff]
    %v2125 = vld [vmem:[#allocation26 + $0x28] sm:$0xff]
    %v2126 = vld [vmem:[#allocation26 + $0x30] sm:$0xff]
    %v2127 = vld [vmem:[#allocation26 + $0x38] sm:$0xff]
    %v2128 = vld [vmem:[#allocation26 + $0x40] sm:$0xff]
    %v2129 = vld [vmem:[#allocation26 + $0x48] sm:$0xff]
    %v2130 = vld [vmem:[#allocation26 + $0x50] sm:$0xff]
    %v2131 = vld [vmem:[#allocation26 + $0x58] sm:$0xff]
    %v2132 = vld [vmem:[#allocation26 + $0x60] sm:$0xff]
    %v2133 = vld [vmem:[#allocation26 + $0x68] sm:$0xff]
    %v2134 = vld [vmem:[#allocation26 + $0x70] sm:$0xff]
    %v2135 = vld [vmem:[#allocation26 + $0x78] sm:$0xff]
    %v2136 = vld [vmem:[#allocation26 + $0x80] sm:$0xff]
    %v2137 = vld [vmem:[#allocation26 + $0x88] sm:$0xff]
    %v2138 = vld [vmem:[#allocation26 + $0x90] sm:$0xff]
    %v2139 = vld [vmem:[#allocation26 + $0x98] sm:$0xff]
    %v2140 = vld [vmem:[#allocation26 + $0xa0] sm:$0xff]
    %v2141 = vld [vmem:[#allocation26 + $0xa8] sm:$0xff]
    %v2142 = vld [vmem:[#allocation26 + $0xb0] sm:$0xff]
    %v2143 = vld [vmem:[#allocation26 + $0xb8] sm:$0xff]
    %v2144 = vld [vmem:[#allocation26 + $0xc0] sm:$0xff]
    %v2145 = vld [vmem:[#allocation26 + $0xc8] sm:$0xff]
    %v2146 = vld [vmem:[#allocation26 + $0xd0] sm:$0xff]
    %v2147 = vld [vmem:[#allocation26 + $0xd8] sm:$0xff]
    %v2148 = vld [vmem:[#allocation26 + $0xe0] sm:$0xff]
    %v2149 = vld [vmem:[#allocation26 + $0xe8] sm:$0xff]
    %v2150 = vld [vmem:[#allocation26 + $0xf0] sm:$0xff]
    %v2151 = vld [vmem:[#allocation26 + $0xf8] sm:$0xff]
    %v2152 = vld [vmem:[%s22] sm:$0x1]
    %v2154 = vlaneseq
    %v2155 = vshrl.u32 %v2154, 7
    %v2156 = vsub.s32 0, %v2155
    %v2157 = vrot.slane %v2152, %v2156
    %2159 = vmatprep.subr.mxu0 0.0
    %2160 = vmatpush1.msra.mxu0 %v2120
    %2161 = vmatprep.subr.mxu0 0.0
    %2162 = vmatpush1.msra.mxu0 %v2121
    %2163 = vmatprep.subr.mxu0 0.0
    %2164 = vmatpush1.msra.mxu0 %v2122
    %2165 = vmatprep.subr.mxu0 0.0
    %2166 = vmatpush1.msra.mxu0 %v2123
    %2167 = vmatprep.subr.mxu0 0.0
    %2168 = vmatpush1.msra.mxu0 %v2124
    %2169 = vmatprep.subr.mxu0 0.0
    %2170 = vmatpush1.msra.mxu0 %v2125
    %2171 = vmatprep.subr.mxu0 0.0
    %2172 = vmatpush1.msra.mxu0 %v2126
    %2173 = vmatprep.subr.mxu0 0.0
    %2174 = vmatpush1.msra.mxu0 %v2127
    %2175 = vmatprep.subr.mxu0 0.0
    %2176 = vmatpush1.msra.mxu0 %v2128
    %2177 = vmatprep.subr.mxu0 0.0
    %2178 = vmatpush1.msra.mxu0 %v2129
    %2179 = vmatprep.subr.mxu0 0.0
    %2180 = vmatpush1.msra.mxu0 %v2130
    %2181 = vmatprep.subr.mxu0 0.0
    %2182 = vmatpush1.msra.mxu0 %v2131
    %2183 = vmatprep.subr.mxu0 0.0
    %2184 = vmatpush1.msra.mxu0 %v2132
    %2185 = vmatprep.subr.mxu0 0.0
    %2186 = vmatpush1.msra.mxu0 %v2133
    %2187 = vmatprep.subr.mxu0 0.0
    %2188 = vmatpush1.msra.mxu0 %v2134
    %2189 = vmatprep.subr.mxu0 0.0
    %2190 = vmatpush1.msra.mxu0 %v2135
    %2191 = vmatprep.subr.mxu0 0.0
    %2192 = vmatpush1.msra.mxu0 %v2136
    %2193 = vmatprep.subr.mxu0 0.0
    %2194 = vmatpush1.msra.mxu0 %v2137
    %2195 = vmatprep.subr.mxu0 0.0
    %2196 = vmatpush1.msra.mxu0 %v2138
    %2197 = vmatprep.subr.mxu0 0.0
    %2198 = vmatpush1.msra.mxu0 %v2139
    %2199 = vmatprep.subr.mxu0 0.0
    %2200 = vmatpush1.msra.mxu0 %v2140
    %2201 = vmatprep.subr.mxu0 0.0
    %2202 = vmatpush1.msra.mxu0 %v2141
    %2203 = vmatprep.subr.mxu0 0.0
    %2204 = vmatpush1.msra.mxu0 %v2142
    %2205 = vmatprep.subr.mxu0 0.0
    %2206 = vmatpush1.msra.mxu0 %v2143
    %2207 = vmatprep.subr.mxu0 0.0
    %2208 = vmatpush1.msra.mxu0 %v2144
    %2209 = vmatprep.subr.mxu0 0.0
    %2210 = vmatpush1.msra.mxu0 %v2145
    %2211 = vmatprep.subr.mxu0 0.0
    %2212 = vmatpush1.msra.mxu0 %v2146
    %2213 = vmatprep.subr.mxu0 0.0
    %2214 = vmatpush1.msra.mxu0 %v2147
    %2215 = vmatprep.subr.mxu0 0.0
    %2216 = vmatpush1.msra.mxu0 %v2148
    %2217 = vmatprep.subr.mxu0 0.0
    %2218 = vmatpush1.msra.mxu0 %v2149
    %2219 = vmatprep.subr.mxu0 0.0
    %2220 = vmatpush1.msra.mxu0 %v2150
    %2221 = vmatprep.subr.mxu0 0.0
    %2222 = vmatpush1.msra.mxu0 %v2151
    %2223 = vmatprep.mubr.f32.mxu0 %v2119
    %2224 = vmatmul.mubr.f32.gmra.mrb[0].mxu0 %v2118
    %v2225 = vpop.f32.mrb[0].mxu0
    %v2226 = vadd.f32 %v2157, %v2225
    %v2227 = vpop.f32.mrb[0].mxu0
    %2228 = vdwg.mxu0
    %2229 = vst [vmem:[#allocation28] sm:$0xff] %v2226
    // Predicated region
    $region158: #{tpu_custom_call.1} parent=1 // pred_check
      _
    $region159: #{tpu_custom_call.1} parent=1 // pred_check_branch
      %2231 = sbr.rel (0) target = $region161
    $region160: #{tpu_custom_call.1} parent=1 // pred_region
      %s2233 = ssub.s32 128, 128
      %2234 = vsyncadd [#allocation4], %s2233
      %s2236 = sshll.u32 [#allocation28], 4
      %s2237 = int_to_ptr.vmem [resolvable:$true] %s2236
      %2239 = dma.vmem_to_hbm [thread:$0]  %s2237, 128, %s23, [#allocation4]
    $region161: #{tpu_custom_call.1} parent=1 // pred_fallthru
      _
    // Predicated region
    $region162: #{tpu_custom_call.1} parent=1 // pred_check
      _
    $region163: #{tpu_custom_call.1} parent=1 // pred_check_branch
      %2241 = sbr.rel (0) target = $region165
    $region164: #{tpu_custom_call.1} parent=1 // pred_region
      %2242 = dma.done [#allocation4], 128
    $region165: #{tpu_custom_call.1} parent=1 // pred_fallthru
      _
    %2243 = vsyncpa [#allocation3], 1
    %2244 = vsyncpa [#allocation6], 1
    %2245 = vsyncpa [#allocation9], 1
    %2246 = vsyncpa [#allocation12], 1
    %2247 = vsyncpa [#allocation15], 1
    %2248 = vsyncpa [#allocation18], 1
    %2249 = vsyncpa [#allocation21], 1
    %2250 = vsyncpa [#allocation24], 1
    %2251 = vsyncpa [#allocation27], 1
    %2252 = vsyncpa [#allocation4], 1

</llo_original>
